<compile_context>
chip_gen: v6e
topology: v6e:2x2x1
jax: 0.10.0
libtpu: 0.0.40
codegen_flags: <defaults>
</compile_context>

<pallas_src>
import functools

import jax
import jax.numpy as jnp
from jax.experimental import pallas as pl
from jax.experimental.pallas import tpu as pltpu

BN_EPS = 1e-5
LANE = 128


def _round_up(x, m):
    return ((x + m - 1) // m) * m


# ------------------------------ Pallas kernel ------------------------------ #

def _gin_fused_kernel(n_real, num_layers, d_pad,
                      a_ref, h0_ref, e_ref, w1_ref, w2_ref, smalls_ref,
                      o_ref):
    """One grid step == one GIN layer; o_ref (resident output) carries h."""
    l = pl.program_id(0)

    @pl.when(l == 0)
    def _():
        o_ref[...] = h0_ref[...]

    h = o_ref[...]                                         # [Np, Dp] f32 carry

    # Message passing ('add' aggregation incl. self loops): A @ h (bf16 MXU)
    # plus the precomputed per-layer edge-embedding contribution e_l.
    aggr = jnp.dot(a_ref[...], h.astype(jnp.bfloat16),
                   preferred_element_type=jnp.float32) + e_ref[...]

    # Packed per-layer small params, resident for all L layers: rows are
    # [b1 (Hp wide), b2, gamma, beta (Dp wide), zero padding].
    s = smalls_ref[l]                                      # [8, Hp] f32
    b1 = s[0:1, :]
    b2 = s[1:2, :d_pad]
    gamma = s[2:3, :d_pad]
    beta = s[3:4, :d_pad]

    # GIN update MLP:  Linear(D, 2D) -> ReLU -> Linear(2D, D).
    h1 = jnp.maximum(
        jnp.dot(aggr.astype(jnp.bfloat16), w1_ref[...],
                preferred_element_type=jnp.float32) + b1, 0.0)
    h2 = jnp.dot(h1.astype(jnp.bfloat16), w2_ref[...],
                 preferred_element_type=jnp.float32) + b2

    # BatchNorm1d (training mode: batch stats, biased variance) in f32,
    # masked to the real (un-padded) node rows with a cheap (Np, 1) mask.
    row = jax.lax.broadcasted_iota(jnp.int32, (h2.shape[0], 1), 0)
    mask = (row < n_real).astype(jnp.float32)
    inv_n = 1.0 / float(n_real)
    mu = jnp.sum(h2 * mask, axis=0, keepdims=True) * inv_n
    diff = h2 - mu
    var = jnp.sum(diff * diff * mask, axis=0, keepdims=True) * inv_n
    hbn = gamma * diff * jax.lax.rsqrt(var + BN_EPS) + beta

    # ReLU on all layers except the last (dropout p=0 is a no-op); exactly one
    # store per layer, writeback to HBM happens once at the end of the grid.
    @pl.when(l < num_layers - 1)
    def _():
        o_ref[...] = jnp.maximum(hbn, 0.0)

    @pl.when(l == num_layers - 1)
    def _():
        o_ref[...] = hbn


# -------------------------- parameters & packing --------------------------- #

def init_params(key, emb_dim, num_layers):
    """Logical (unpadded) parameters, stacked with a leading layer axis."""
    d, L = emb_dim, num_layers
    keys = jax.random.split(key, 7)
    p = {
        "node_embedding": 0.1 * jax.random.normal(keys[0], (908, d), jnp.float32),
        "edge_emb1": 0.1 * jax.random.normal(keys[1], (L, 5, d), jnp.float32),
        "edge_emb2": 0.1 * jax.random.normal(keys[2], (L, 3, d), jnp.float32),
        "w1": 0.1 * jax.random.normal(keys[3], (L, d, 2 * d), jnp.float32),
        "b1": 0.01 * jax.random.normal(keys[4], (L, 1, 2 * d), jnp.float32),
        "w2": 0.1 * jax.random.normal(keys[5], (L, 2 * d, d), jnp.float32),
        "b2": 0.01 * jax.random.normal(keys[6], (L, 1, d), jnp.float32),
        "gamma": jnp.ones((L, 1, d), jnp.float32),
        "beta": jnp.zeros((L, 1, d), jnp.float32),
    }
    return p


def pack_params(p):
    """Zero-pad feature dims to lane width, pack small per-layer tensors."""
    d = p["node_embedding"].shape[1]
    L = p["w1"].shape[0]
    dp = _round_up(d, LANE)
    hp = _round_up(2 * d, LANE)

    ee = jnp.zeros((L, 16, dp), jnp.float32)
    ee = ee.at[:, 0:5, :d].set(p["edge_emb1"])     # bond-type embeddings
    ee = ee.at[:, 5:8, :d].set(p["edge_emb2"])     # bond-dir embeddings

    w1 = (jnp.zeros((L, dp, hp), jnp.float32)
          .at[:, :d, :2 * d].set(p["w1"])).astype(jnp.bfloat16)
    w2 = (jnp.zeros((L, hp, dp), jnp.float32)
          .at[:, :2 * d, :d].set(p["w2"])).astype(jnp.bfloat16)

    # Packed small per-layer tensors, one resident array:
    # row 0: b1 (Hp wide), row 1: b2, row 2: gamma, row 3: beta, rows 4-7: pad.
    smalls = jnp.zeros((L, 8, hp), jnp.float32)
    smalls = smalls.at[:, 0, :2 * d].set(p["b1"][:, 0, :])
    smalls = smalls.at[:, 1, :d].set(p["b2"][:, 0, :])
    smalls = smalls.at[:, 2, :d].set(p["gamma"][:, 0, :])
    smalls = smalls.at[:, 3, :d].set(p["beta"][:, 0, :])

    return {
        "node_embedding": p["node_embedding"],
        "ee": ee, "w1": w1, "w2": w2, "smalls": smalls,
        "emb_dim": d, "num_layers": L, "dp": dp, "hp": hp,
    }


# ------------------------- graph preprocessing glue ------------------------ #

def build_graph_operands(x_idx, edge_index, edge_attr, node_emb, dp):
    """Indexing glue done ONCE per forward (outside the layer loop / kernel)."""
    n = x_idx.shape[0]
    np_ = _round_up(n, LANE)          # lane-aligned node axis (unmasked MXU/vst)
    d = node_emb.shape[1]

    # add_self_loops; self-loop edge_attr = [4, 0]
    loops = jnp.arange(n, dtype=edge_index.dtype)
    src = jnp.concatenate([edge_index[0], loops])
    dst = jnp.concatenate([edge_index[1], loops])
    bond_type = jnp.concatenate([edge_attr[:, 0],
                                 jnp.full((n,), 4, edge_attr.dtype)])
    bond_dir = jnp.concatenate([edge_attr[:, 1],
                                jnp.zeros((n,), edge_attr.dtype)])

    # Dense adjacency for 'add' aggregation: A[dst, src] += 1 (exact in bf16).
    adj = (jnp.zeros((np_, np_), jnp.float32)
           .at[dst, src].add(1.0)).astype(jnp.bfloat16)

    # Per-destination counts of bond types (cols 0..4) and bond dirs (cols 5..7).
    cnt = jnp.zeros((np_, 16), jnp.float32)
    cnt = cnt.at[dst, bond_type].add(1.0)
    cnt = cnt.at[dst, 5 + bond_dir].add(1.0)

    # Initial node embedding lookup, zero-padded to [Np, Dp].
    h0 = jnp.zeros((np_, dp), jnp.float32)
    h0 = h0.at[:n, :d].set(jnp.take(node_emb, x_idx[:, 0], axis=0))
    return adj, cnt, h0, n, np_


# --------------------------- VMEM budget / limits --------------------------- #

def _vmem_budget_bytes(np_, dp, hp, L):
    resident = (np_ * np_ * 2          # A (bf16)
                + np_ * dp * 4         # h0
                + np_ * dp * 4         # out block (layer carry)
                + L * 8 * hp * 4)      # packed small params, all layers
    streamed = (np_ * dp * 4           # e_l
                + dp * hp * 2          # W1_l (bf16)
                + hp * dp * 2)         # W2_l (bf16)
    temps = np_ * hp * 4 + 4 * np_ * dp * 4
    # x2 allows the pipeliner to double-buffer anything it chooses to.
    return 2 * (resident + streamed) + temps


def _vmem_limit_bytes(budget):
    cap = None
    try:
        cap = getattr(pltpu.get_tpu_info(), "vmem_capacity_bytes", None)
    except Exception:
        cap = None
    if not cap:
        cap = 64 << 20                 # conservative: v7x per-TensorCore VMEM
    usable = int(0.85 * cap)           # headroom for compiler scratch/semaphores
    if budget > usable:
        raise NotImplementedError(
            "dense-adjacency GIN path needs %d B VMEM but only %d B usable on "
            "this TPU generation; TODO(synk): node-tiled sparse-gather path"
            % (budget, usable))
    return max(min(budget + (4 << 20), usable), 16 << 20)


# ------------------------------- forward pass ------------------------------ #

def gin_forward(packed, x_idx, edge_index, edge_attr):
    d, L = packed["emb_dim"], packed["num_layers"]
    dp, hp = packed["dp"], packed["hp"]
    adj, cnt, h0, n, np_ = build_graph_operands(
        x_idx, edge_index, edge_attr, packed["node_embedding"], dp)

    # Per-layer edge-embedding contribution precomputed once in XLA; removes
    # the degenerate K=16 MXU matmul (and the lane-sparse counts buffer) from
    # the kernel.
    e_all = jnp.einsum("nk,lkd->lnd", cnt, packed["ee"])   # [L, Np, Dp] f32

    kern = functools.partial(_gin_fused_kernel, n, L, dp)

    flops = L * (2 * np_ * np_ * dp + 2 * np_ * dp * hp + 2 * np_ * hp * dp
                 + 12 * np_ * dp)
    bytes_acc = (adj.size * 2 + h0.size * 4 + e_all.size * 4
                 + packed["w1"].size * 2 + packed["w2"].size * 2
                 + packed["smalls"].size * 4 + np_ * dp * 4)

    vmem_limit = _vmem_limit_bytes(_vmem_budget_bytes(np_, dp, hp, L))

    operands = (adj, h0, e_all, packed["w1"], packed["w2"], packed["smalls"])

    def call(single_buffer_resident):
        # Grid-invariant (constant block index) inputs are not re-DMA'd across
        # layers; single-buffering them further halves their VMEM footprint.
        extra = ({"pipeline_mode": pl.Buffered(buffer_count=1)}
                 if single_buffer_resident else {})
        grid_spec = pltpu.PrefetchScalarGridSpec(
            num_scalar_prefetch=0,
            grid=(L,),
            in_specs=[
                pl.BlockSpec((np_, np_), lambda l: (0, 0), **extra),      # A
                pl.BlockSpec((np_, dp), lambda l: (0, 0), **extra),       # h0
                pl.BlockSpec((None, np_, dp), lambda l: (l, 0, 0)),       # e_l
                pl.BlockSpec((None, dp, hp), lambda l: (l, 0, 0)),        # W1_l
                pl.BlockSpec((None, hp, dp), lambda l: (l, 0, 0)),        # W2_l
                pl.BlockSpec((L, 8, hp), lambda l: (0, 0, 0), **extra),   # smalls
            ],
            out_specs=pl.BlockSpec((np_, dp), lambda l: (0, 0)),          # carry
        )
        return pl.pallas_call(
            kern,
            out_shape=jax.ShapeDtypeStruct((np_, dp), jnp.float32),
            grid_spec=grid_spec,
            compiler_params=pltpu.CompilerParams(
                dimension_semantics=("arbitrary",),
                vmem_limit_bytes=vmem_limit),
            cost_estimate=pl.CostEstimate(flops=flops, transcendentals=L * dp,
                                          bytes_accessed=bytes_acc),
        )(*operands)

    try:
        out = jax.block_until_ready(call(True))
    except Exception:
        # Fallback for jax versions without BlockSpec pipeline_mode support.
        out = call(False)

    return out[:n, :d]


# -------------------- pure-JAX reference (same math/dtypes) ----------------- #

def gin_reference(packed, x_idx, edge_index, edge_attr):
    d, L = packed["emb_dim"], packed["num_layers"]
    dp = packed["dp"]
    adj, cnt, h0, n, np_ = build_graph_operands(
        x_idx, edge_index, edge_attr, packed["node_embedding"], dp)
    e_all = jnp.einsum("nk,lkd->lnd", cnt, packed["ee"])
    smalls = packed["smalls"]

    mask = (jnp.arange(np_) < n).astype(jnp.float32)[:, None]
    inv_n = 1.0 / float(n)
    h = h0
    for l in range(L):
        aggr = jnp.dot(adj, h.astype(jnp.bfloat16),
                       preferred_element_type=jnp.float32) + e_all[l]
        b1 = smalls[l, 0:1, :]
        b2 = smalls[l, 1:2, :dp]
        gamma = smalls[l, 2:3, :dp]
        beta = smalls[l, 3:4, :dp]
        h1 = jnp.maximum(
            jnp.dot(aggr.astype(jnp.bfloat16), packed["w1"][l],
                    preferred_element_type=jnp.float32) + b1, 0.0)
        h2 = jnp.dot(h1.astype(jnp.bfloat16), packed["w2"][l],
                     preferred_element_type=jnp.float32) + b2
        mu = jnp.sum(h2 * mask, axis=0, keepdims=True) * inv_n
        diff = h2 - mu
        var = jnp.sum(diff * diff * mask, axis=0, keepdims=True) * inv_n
        h = gamma * diff * jax.lax.rsqrt(var + BN_EPS) + beta
        if l != L - 1:
            h = jnp.maximum(h, 0.0)
    return h[:n, :d]


# ----------------------------------- main ----------------------------------- #

if __name__ == "__main__":
    EMB_DIM = 32        # (module default 300; kept small for the demo -> Dp=128)
    NUM_LAYERS = 5      # typical config (spec requires >= 2)
    N_NODES = 16
    N_EDGES = 32        # directed edges before self loops

    key = jax.random.PRNGKey(0)
    kp, kx, ka1, ka2 = jax.random.split(key, 4)

    params = init_params(kp, EMB_DIM, NUM_LAYERS)
    packed = pack_params(params)

    # node features: [N, 2] int indices; only column 0 is used (atom=False)
    x_idx = jax.random.randint(kx, (N_NODES, 2), 0, 908, dtype=jnp.int32)

    # a ring graph in both directions -> 32 directed edges
    ring = jnp.arange(N_NODES, dtype=jnp.int32)
    src = jnp.concatenate([ring, (ring + 1) % N_NODES])
    dst = jnp.concatenate([(ring + 1) % N_NODES, ring])
    edge_index = jnp.stack([src, dst], axis=0)                         # [2, 32]

    # edge_attr: bond type in [0,4), bond dir in [0,3)
    edge_attr = jnp.concatenate(
        [jax.random.randint(ka1, (N_EDGES, 1), 0, 4, dtype=jnp.int32),
         jax.random.randint(ka2, (N_EDGES, 1), 0, 3, dtype=jnp.int32)],
        axis=1)                                                        # [32, 2]

    out = jax.block_until_ready(gin_forward(packed, x_idx, edge_index, edge_attr))
    ref = jax.block_until_ready(gin_reference(packed, x_idx, edge_index, edge_attr))

    assert out.shape == (N_NODES, EMB_DIM)
    assert bool(jnp.all(jnp.isfinite(out)))
    assert jnp.allclose(out, ref, atol=1e-3, rtol=1e-3), "mismatch vs reference"
    print("KERNEL_OK")
</pallas_src>

<mosaic_0001>
module attributes {stable_mosaic.version = 11 : i64} {
  func.func @_gin_fused_kernel(%arg0: i32, %arg1: memref<128x128xbf16, #tpu.memory_space<vmem>>, %arg2: memref<128x128xf32, #tpu.memory_space<vmem>>, %arg3: memref<1x128x128xf32, #tpu.memory_space<vmem>>, %arg4: memref<1x128x128xbf16, #tpu.memory_space<vmem>>, %arg5: memref<1x128x128xbf16, #tpu.memory_space<vmem>>, %arg6: memref<5x8x128xf32, #tpu.memory_space<vmem>>, %arg7: memref<128x128xf32, #tpu.memory_space<vmem>>) attributes {dimension_semantics = [#tpu.dimension_semantics<arbitrary>], iteration_bounds = array<i64: 5>, scalar_prefetch = 0 : i64, scratch_operands = 0 : i64, tpu.core_type = #tpu.core_type<tc>, window_params = [{pipeline_mode = #tpu.pipeline_mode<synchronous>, transform_indices = @transform_0, window_bounds = array<i64: 128, 128>}, {pipeline_mode = #tpu.pipeline_mode<synchronous>, transform_indices = @transform_1, window_bounds = array<i64: 128, 128>}, {transform_indices = @transform_2, window_bounds = array<i64: 1, 128, 128>}, {transform_indices = @transform_3, window_bounds = array<i64: 1, 128, 128>}, {transform_indices = @transform_4, window_bounds = array<i64: 1, 128, 128>}, {pipeline_mode = #tpu.pipeline_mode<synchronous>, transform_indices = @transform_5, window_bounds = array<i64: 5, 8, 128>}, {pipeline_mode = #tpu.pipeline_mode<synchronous>, transform_indices = @transform_6, window_bounds = array<i64: 128, 128>}]} {
    %c0_i32 = arith.constant 0 : i32
    %0 = arith.cmpi eq, %arg0, %c0_i32 : i32
    %1 = arith.extui %0 : i1 to i32
    %c0_i32_0 = arith.constant 0 : i32
    %2 = arith.cmpi ne, %1, %c0_i32_0 : i32
    scf.if %2 {
      %c0_26 = arith.constant 0 : index
      %c0_27 = arith.constant 0 : index
      %66 = vector.load %arg2[%c0_26, %c0_27] : memref<128x128xf32, #tpu.memory_space<vmem>>, vector<128x128xf32>
      %c0_28 = arith.constant 0 : index
      %c0_29 = arith.constant 0 : index
      %67 = vector.load %arg7[%c0_28, %c0_29] : memref<128x128xf32, #tpu.memory_space<vmem>>, vector<128x128xf32>
      tpu.vector_store %arg7[%c0_28, %c0_29], %66 {strides = array<i32>} : memref<128x128xf32, #tpu.memory_space<vmem>>, vector<128x128xf32>,
    } else {
    }
    %c0 = arith.constant 0 : index
    %c0_1 = arith.constant 0 : index
    %3 = vector.load %arg7[%c0, %c0_1] : memref<128x128xf32, #tpu.memory_space<vmem>>, vector<128x128xf32>
    %c0_2 = arith.constant 0 : index
    %c0_3 = arith.constant 0 : index
    %4 = vector.load %arg1[%c0_2, %c0_3] : memref<128x128xbf16, #tpu.memory_space<vmem>>, vector<128x128xbf16>
    %5 = arith.truncf %3 : vector<128x128xf32> to vector<128x128xbf16>
    %cst = arith.constant dense<0.000000e+00> : vector<128x128xf32>
    %6 = tpu.matmul %4, %5, %cst {dimension_numbers = #tpu.dot_dimension_numbers<[1], [0], [0], [1], [0, 0, 1, 1], [], []>} : vector<128x128xbf16>, vector<128x128xbf16>, vector<128x128xf32> -> vector<128x128xf32>
    %c0_4 = arith.constant 0 : index
    %c0_5 = arith.constant 0 : index
    %c0_6 = arith.constant 0 : index
    %7 = vector.load %arg3[%c0_4, %c0_5, %c0_6] : memref<1x128x128xf32, #tpu.memory_space<vmem>>, vector<1x128x128xf32>
    %8 = vector.shape_cast %7 : vector<1x128x128xf32> to vector<128x128xf32>
    %9 = arith.addf %6, %8 : vector<128x128xf32>
    %10 = arith.index_cast %arg0 : i32 to index
    %c0_7 = arith.constant 0 : index
    %c0_8 = arith.constant 0 : index
    %11 = vector.load %arg6[%10, %c0_7, %c0_8] : memref<5x8x128xf32, #tpu.memory_space<vmem>>, vector<1x8x128xf32>
    %12 = vector.shape_cast %11 : vector<1x8x128xf32> to vector<8x128xf32>
    %13 = vector.extract_strided_slice %12 {offsets = [0, 0], sizes = [1, 128], strides = [1, 1]} : vector<8x128xf32> to vector<1x128xf32>
    %14 = vector.extract_strided_slice %12 {offsets = [1, 0], sizes = [1, 128], strides = [1, 1]} : vector<8x128xf32> to vector<1x128xf32>
    %15 = vector.extract_strided_slice %12 {offsets = [2, 0], sizes = [1, 128], strides = [1, 1]} : vector<8x128xf32> to vector<1x128xf32>
    %16 = vector.extract_strided_slice %12 {offsets = [3, 0], sizes = [1, 128], strides = [1, 1]} : vector<8x128xf32> to vector<1x128xf32>
    %17 = arith.truncf %9 : vector<128x128xf32> to vector<128x128xbf16>
    %c0_9 = arith.constant 0 : index
    %c0_10 = arith.constant 0 : index
    %c0_11 = arith.constant 0 : index
    %18 = vector.load %arg4[%c0_9, %c0_10, %c0_11] : memref<1x128x128xbf16, #tpu.memory_space<vmem>>, vector<1x128x128xbf16>
    %19 = vector.shape_cast %18 : vector<1x128x128xbf16> to vector<128x128xbf16>
    %cst_12 = arith.constant dense<0.000000e+00> : vector<128x128xf32>
    %20 = tpu.matmul %17, %19, %cst_12 {dimension_numbers = #tpu.dot_dimension_numbers<[1], [0], [0], [1], [0, 0, 1, 1], [], []>} : vector<128x128xbf16>, vector<128x128xbf16>, vector<128x128xf32> -> vector<128x128xf32>
    %21 = vector.broadcast %13 : vector<1x128xf32> to vector<128x128xf32>
    %22 = arith.addf %20, %21 : vector<128x128xf32>
    %cst_13 = arith.constant 0.000000e+00 : f32
    %23 = vector.broadcast %cst_13 : f32 to vector<128x128xf32>
    %24 = arith.maximumf %22, %23 : vector<128x128xf32>
    %25 = arith.truncf %24 : vector<128x128xf32> to vector<128x128xbf16>
    %c0_14 = arith.constant 0 : index
    %c0_15 = arith.constant 0 : index
    %c0_16 = arith.constant 0 : index
    %26 = vector.load %arg5[%c0_14, %c0_15, %c0_16] : memref<1x128x128xbf16, #tpu.memory_space<vmem>>, vector<1x128x128xbf16>
    %27 = vector.shape_cast %26 : vector<1x128x128xbf16> to vector<128x128xbf16>
    %cst_17 = arith.constant dense<0.000000e+00> : vector<128x128xf32>
    %28 = tpu.matmul %25, %27, %cst_17 {dimension_numbers = #tpu.dot_dimension_numbers<[1], [0], [0], [1], [0, 0, 1, 1], [], []>} : vector<128x128xbf16>, vector<128x128xbf16>, vector<128x128xf32> -> vector<128x128xf32>
    %29 = vector.broadcast %14 : vector<1x128xf32> to vector<128x128xf32>
    %30 = arith.addf %28, %29 : vector<128x128xf32>
    %31 = tpu.iota {dimensions = array<i32: 0>} : vector<128x1xi32>
    %c16_i32 = arith.constant 16 : i32
    %32 = vector.broadcast %c16_i32 : i32 to vector<128x1xi32>
    %33 = arith.cmpi slt, %31, %32 : vector<128x1xi32>
    %34 = arith.extui %33 : vector<128x1xi1> to vector<128x1xi32>
    %35 = arith.sitofp %34 : vector<128x1xi32> to vector<128x1xf32>
    %36 = vector.broadcast %35 : vector<128x1xf32> to vector<128x128xf32>
    %37 = arith.mulf %30, %36 : vector<128x128xf32>
    %cst_18 = arith.constant dense<0.000000e+00> : vector<128xf32>
    %38 = vector.multi_reduction <add>, %37, %cst_18 [0] : vector<128x128xf32> to vector<128xf32>
    %39 = vector.shape_cast %38 : vector<128xf32> to vector<1x128xf32>
    %cst_19 = arith.constant 6.250000e-02 : f32
    %40 = vector.broadcast %cst_19 : f32 to vector<1x128xf32>
    %41 = arith.mulf %39, %40 : vector<1x128xf32>
    %42 = vector.broadcast %41 : vector<1x128xf32> to vector<128x128xf32>
    %43 = arith.subf %30, %42 : vector<128x128xf32>
    %44 = arith.mulf %43, %43 : vector<128x128xf32>
    %45 = vector.broadcast %35 : vector<128x1xf32> to vector<128x128xf32>
    %46 = arith.mulf %44, %45 : vector<128x128xf32>
    %cst_20 = arith.constant dense<0.000000e+00> : vector<128xf32>
    %47 = vector.multi_reduction <add>, %46, %cst_20 [0] : vector<128x128xf32> to vector<128xf32>
    %48 = vector.shape_cast %47 : vector<128xf32> to vector<1x128xf32>
    %cst_21 = arith.constant 6.250000e-02 : f32
    %49 = vector.broadcast %cst_21 : f32 to vector<1x128xf32>
    %50 = arith.mulf %48, %49 : vector<1x128xf32>
    %51 = vector.broadcast %15 : vector<1x128xf32> to vector<128x128xf32>
    %52 = arith.mulf %51, %43 : vector<128x128xf32>
    %cst_22 = arith.constant 9.99999974E-6 : f32
    %53 = vector.broadcast %cst_22 : f32 to vector<1x128xf32>
    %54 = arith.addf %50, %53 : vector<1x128xf32>
    %55 = math.rsqrt %54 : vector<1x128xf32>
    %56 = vector.broadcast %55 : vector<1x128xf32> to vector<128x128xf32>
    %57 = arith.mulf %52, %56 : vector<128x128xf32>
    %58 = vector.broadcast %16 : vector<1x128xf32> to vector<128x128xf32>
    %59 = arith.addf %57, %58 : vector<128x128xf32>
    %c4_i32 = arith.constant 4 : i32
    %60 = arith.cmpi slt, %arg0, %c4_i32 : i32
    %61 = arith.extui %60 : i1 to i32
    %c0_i32_23 = arith.constant 0 : i32
    %62 = arith.cmpi ne, %61, %c0_i32_23 : i32
    scf.if %62 {
      %cst_26 = arith.constant 0.000000e+00 : f32
      %66 = vector.broadcast %cst_26 : f32 to vector<128x128xf32>
      %67 = arith.maximumf %59, %66 : vector<128x128xf32>
      %c0_27 = arith.constant 0 : index
      %c0_28 = arith.constant 0 : index
      %68 = vector.load %arg7[%c0_27, %c0_28] : memref<128x128xf32, #tpu.memory_space<vmem>>, vector<128x128xf32>
      tpu.vector_store %arg7[%c0_27, %c0_28], %67 {strides = array<i32>} : memref<128x128xf32, #tpu.memory_space<vmem>>, vector<128x128xf32>,
    } else {
    }
    %c4_i32_24 = arith.constant 4 : i32
    %63 = arith.cmpi eq, %arg0, %c4_i32_24 : i32
    %64 = arith.extui %63 : i1 to i32
    %c0_i32_25 = arith.constant 0 : i32
    %65 = arith.cmpi ne, %64, %c0_i32_25 : i32
    scf.if %65 {
      %c0_26 = arith.constant 0 : index
      %c0_27 = arith.constant 0 : index
      %66 = vector.load %arg7[%c0_26, %c0_27] : memref<128x128xf32, #tpu.memory_space<vmem>>, vector<128x128xf32>
      tpu.vector_store %arg7[%c0_26, %c0_27], %59 {strides = array<i32>} : memref<128x128xf32, #tpu.memory_space<vmem>>, vector<128x128xf32>,
    } else {
    }
    return
  }
  func.func @transform_0(%arg0: i32) -> (i32, i32) {
    %c0_i32 = arith.constant 0 : i32
    %c0_i32_0 = arith.constant 0 : i32
    %c0_i32_1 = arith.constant 0 : i32
    return %c0_i32, %c0_i32_0 : i32, i32
  }
  func.func @transform_1(%arg0: i32) -> (i32, i32) {
    %c0_i32 = arith.constant 0 : i32
    %c0_i32_0 = arith.constant 0 : i32
    %c0_i32_1 = arith.constant 0 : i32
    return %c0_i32, %c0_i32_0 : i32, i32
  }
  func.func @transform_2(%arg0: i32) -> (i32, i32, i32) {
    %c0_i32 = arith.constant 0 : i32
    %c0_i32_0 = arith.constant 0 : i32
    %c0_i32_1 = arith.constant 0 : i32
    return %arg0, %c0_i32, %c0_i32_0 : i32, i32, i32
  }
  func.func @transform_3(%arg0: i32) -> (i32, i32, i32) {
    %c0_i32 = arith.constant 0 : i32
    %c0_i32_0 = arith.constant 0 : i32
    %c0_i32_1 = arith.constant 0 : i32
    return %arg0, %c0_i32, %c0_i32_0 : i32, i32, i32
  }
  func.func @transform_4(%arg0: i32) -> (i32, i32, i32) {
    %c0_i32 = arith.constant 0 : i32
    %c0_i32_0 = arith.constant 0 : i32
    %c0_i32_1 = arith.constant 0 : i32
    return %arg0, %c0_i32, %c0_i32_0 : i32, i32, i32
  }
  func.func @transform_5(%arg0: i32) -> (i32, i32, i32) {
    %c0_i32 = arith.constant 0 : i32
    %c0_i32_0 = arith.constant 0 : i32
    %c0_i32_1 = arith.constant 0 : i32
    %c0_i32_2 = arith.constant 0 : i32
    return %c0_i32, %c0_i32_0, %c0_i32_1 : i32, i32, i32
  }
  func.func @transform_6(%arg0: i32) -> (i32, i32) {
    %c0_i32 = arith.constant 0 : i32
    %c0_i32_0 = arith.constant 0 : i32
    %c0_i32_1 = arith.constant 0 : i32
    return %c0_i32, %c0_i32_0 : i32, i32
  }
}

module attributes {stable_mosaic.version = 11 : i64} {
  func.func @_gin_fused_kernel(%arg0: i32, %arg1: memref<128x128xbf16, #tpu.memory_space<vmem>>, %arg2: memref<128x128xf32, #tpu.memory_space<vmem>>, %arg3: memref<1x128x128xf32, #tpu.memory_space<vmem>>, %arg4: memref<1x128x128xbf16, #tpu.memory_space<vmem>>, %arg5: memref<1x128x128xbf16, #tpu.memory_space<vmem>>, %arg6: memref<5x8x128xf32, #tpu.memory_space<vmem>>, %arg7: memref<128x128xf32, #tpu.memory_space<vmem>>) attributes {dimension_semantics = [#tpu.dimension_semantics<arbitrary>], iteration_bounds = array<i64: 5>, scalar_prefetch = 0 : i64, scratch_operands = 0 : i64, tpu.core_type = #tpu.core_type<tc>, window_params = [{pipeline_mode = #tpu.pipeline_mode<synchronous>, transform_indices = @transform_0, window_bounds = array<i64: 128, 128>}, {pipeline_mode = #tpu.pipeline_mode<synchronous>, transform_indices = @transform_1, window_bounds = array<i64: 128, 128>}, {transform_indices = @transform_2, window_bounds = array<i64: 1, 128, 128>}, {transform_indices = @transform_3, window_bounds = array<i64: 1, 128, 128>}, {transform_indices = @transform_4, window_bounds = array<i64: 1, 128, 128>}, {pipeline_mode = #tpu.pipeline_mode<synchronous>, transform_indices = @transform_5, window_bounds = array<i64: 5, 8, 128>}, {pipeline_mode = #tpu.pipeline_mode<synchronous>, transform_indices = @transform_6, window_bounds = array<i64: 128, 128>}]} {
    %c0_i32 = arith.constant 0 : i32
    %0 = arith.cmpi eq, %arg0, %c0_i32 : i32
    %1 = arith.extui %0 : i1 to i32
    %c0_i32_0 = arith.constant 0 : i32
    %2 = arith.cmpi ne, %1, %c0_i32_0 : i32
    scf.if %2 {
      %c0_26 = arith.constant 0 : index
      %c0_27 = arith.constant 0 : index
      %66 = vector.load %arg2[%c0_26, %c0_27] : memref<128x128xf32, #tpu.memory_space<vmem>>, vector<128x128xf32>
      %c0_28 = arith.constant 0 : index
      %c0_29 = arith.constant 0 : index
      %67 = vector.load %arg7[%c0_28, %c0_29] : memref<128x128xf32, #tpu.memory_space<vmem>>, vector<128x128xf32>
      tpu.vector_store %arg7[%c0_28, %c0_29], %66 {strides = array<i32>} : memref<128x128xf32, #tpu.memory_space<vmem>>, vector<128x128xf32>,
    } else {
    }
    %c0 = arith.constant 0 : index
    %c0_1 = arith.constant 0 : index
    %3 = vector.load %arg7[%c0, %c0_1] : memref<128x128xf32, #tpu.memory_space<vmem>>, vector<128x128xf32>
    %c0_2 = arith.constant 0 : index
    %c0_3 = arith.constant 0 : index
    %4 = vector.load %arg1[%c0_2, %c0_3] : memref<128x128xbf16, #tpu.memory_space<vmem>>, vector<128x128xbf16>
    %5 = arith.truncf %3 : vector<128x128xf32> to vector<128x128xbf16>
    %cst = arith.constant dense<0.000000e+00> : vector<128x128xf32>
    %6 = tpu.matmul %4, %5, %cst {dimension_numbers = #tpu.dot_dimension_numbers<[1], [0], [0], [1], [0, 0, 1, 1], [], []>} : vector<128x128xbf16>, vector<128x128xbf16>, vector<128x128xf32> -> vector<128x128xf32>
    %c0_4 = arith.constant 0 : index
    %c0_5 = arith.constant 0 : index
    %c0_6 = arith.constant 0 : index
    %7 = vector.load %arg3[%c0_4, %c0_5, %c0_6] : memref<1x128x128xf32, #tpu.memory_space<vmem>>, vector<1x128x128xf32>
    %8 = vector.shape_cast %7 : vector<1x128x128xf32> to vector<128x128xf32>
    %9 = arith.addf %6, %8 : vector<128x128xf32>
    %10 = arith.index_cast %arg0 : i32 to index
    %c0_7 = arith.constant 0 : index
    %c0_8 = arith.constant 0 : index
    %11 = vector.load %arg6[%10, %c0_7, %c0_8] : memref<5x8x128xf32, #tpu.memory_space<vmem>>, vector<1x8x128xf32>
    %12 = vector.shape_cast %11 : vector<1x8x128xf32> to vector<8x128xf32>
    %13 = vector.extract_strided_slice %12 {offsets = [0, 0], sizes = [1, 128], strides = [1, 1]} : vector<8x128xf32> to vector<1x128xf32>
    %14 = vector.extract_strided_slice %12 {offsets = [1, 0], sizes = [1, 128], strides = [1, 1]} : vector<8x128xf32> to vector<1x128xf32>
    %15 = vector.extract_strided_slice %12 {offsets = [2, 0], sizes = [1, 128], strides = [1, 1]} : vector<8x128xf32> to vector<1x128xf32>
    %16 = vector.extract_strided_slice %12 {offsets = [3, 0], sizes = [1, 128], strides = [1, 1]} : vector<8x128xf32> to vector<1x128xf32>
    %17 = arith.truncf %9 : vector<128x128xf32> to vector<128x128xbf16>
    %c0_9 = arith.constant 0 : index
    %c0_10 = arith.constant 0 : index
    %c0_11 = arith.constant 0 : index
    %18 = vector.load %arg4[%c0_9, %c0_10, %c0_11] : memref<1x128x128xbf16, #tpu.memory_space<vmem>>, vector<1x128x128xbf16>
    %19 = vector.shape_cast %18 : vector<1x128x128xbf16> to vector<128x128xbf16>
    %cst_12 = arith.constant dense<0.000000e+00> : vector<128x128xf32>
    %20 = tpu.matmul %17, %19, %cst_12 {dimension_numbers = #tpu.dot_dimension_numbers<[1], [0], [0], [1], [0, 0, 1, 1], [], []>} : vector<128x128xbf16>, vector<128x128xbf16>, vector<128x128xf32> -> vector<128x128xf32>
    %21 = vector.broadcast %13 : vector<1x128xf32> to vector<128x128xf32>
    %22 = arith.addf %20, %21 : vector<128x128xf32>
    %cst_13 = arith.constant 0.000000e+00 : f32
    %23 = vector.broadcast %cst_13 : f32 to vector<128x128xf32>
    %24 = arith.maximumf %22, %23 : vector<128x128xf32>
    %25 = arith.truncf %24 : vector<128x128xf32> to vector<128x128xbf16>
    %c0_14 = arith.constant 0 : index
    %c0_15 = arith.constant 0 : index
    %c0_16 = arith.constant 0 : index
    %26 = vector.load %arg5[%c0_14, %c0_15, %c0_16] : memref<1x128x128xbf16, #tpu.memory_space<vmem>>, vector<1x128x128xbf16>
    %27 = vector.shape_cast %26 : vector<1x128x128xbf16> to vector<128x128xbf16>
    %cst_17 = arith.constant dense<0.000000e+00> : vector<128x128xf32>
    %28 = tpu.matmul %25, %27, %cst_17 {dimension_numbers = #tpu.dot_dimension_numbers<[1], [0], [0], [1], [0, 0, 1, 1], [], []>} : vector<128x128xbf16>, vector<128x128xbf16>, vector<128x128xf32> -> vector<128x128xf32>
    %29 = vector.broadcast %14 : vector<1x128xf32> to vector<128x128xf32>
    %30 = arith.addf %28, %29 : vector<128x128xf32>
    %31 = tpu.iota {dimensions = array<i32: 0>} : vector<128x1xi32>
    %c16_i32 = arith.constant 16 : i32
    %32 = vector.broadcast %c16_i32 : i32 to vector<128x1xi32>
    %33 = arith.cmpi slt, %31, %32 : vector<128x1xi32>
    %34 = arith.extui %33 : vector<128x1xi1> to vector<128x1xi32>
    %35 = arith.sitofp %34 : vector<128x1xi32> to vector<128x1xf32>
    %36 = vector.broadcast %35 : vector<128x1xf32> to vector<128x128xf32>
    %37 = arith.mulf %30, %36 : vector<128x128xf32>
    %cst_18 = arith.constant dense<0.000000e+00> : vector<128xf32>
    %38 = vector.multi_reduction <add>, %37, %cst_18 [0] : vector<128x128xf32> to vector<128xf32>
    %39 = vector.shape_cast %38 : vector<128xf32> to vector<1x128xf32>
    %cst_19 = arith.constant 6.250000e-02 : f32
    %40 = vector.broadcast %cst_19 : f32 to vector<1x128xf32>
    %41 = arith.mulf %39, %40 : vector<1x128xf32>
    %42 = vector.broadcast %41 : vector<1x128xf32> to vector<128x128xf32>
    %43 = arith.subf %30, %42 : vector<128x128xf32>
    %44 = arith.mulf %43, %43 : vector<128x128xf32>
    %45 = vector.broadcast %35 : vector<128x1xf32> to vector<128x128xf32>
    %46 = arith.mulf %44, %45 : vector<128x128xf32>
    %cst_20 = arith.constant dense<0.000000e+00> : vector<128xf32>
    %47 = vector.multi_reduction <add>, %46, %cst_20 [0] : vector<128x128xf32> to vector<128xf32>
    %48 = vector.shape_cast %47 : vector<128xf32> to vector<1x128xf32>
    %cst_21 = arith.constant 6.250000e-02 : f32
    %49 = vector.broadcast %cst_21 : f32 to vector<1x128xf32>
    %50 = arith.mulf %48, %49 : vector<1x128xf32>
    %51 = vector.broadcast %15 : vector<1x128xf32> to vector<128x128xf32>
    %52 = arith.mulf %51, %43 : vector<128x128xf32>
    %cst_22 = arith.constant 9.99999974E-6 : f32
    %53 = vector.broadcast %cst_22 : f32 to vector<1x128xf32>
    %54 = arith.addf %50, %53 : vector<1x128xf32>
    %55 = math.rsqrt %54 : vector<1x128xf32>
    %56 = vector.broadcast %55 : vector<1x128xf32> to vector<128x128xf32>
    %57 = arith.mulf %52, %56 : vector<128x128xf32>
    %58 = vector.broadcast %16 : vector<1x128xf32> to vector<128x128xf32>
    %59 = arith.addf %57, %58 : vector<128x128xf32>
    %c4_i32 = arith.constant 4 : i32
    %60 = arith.cmpi slt, %arg0, %c4_i32 : i32
    %61 = arith.extui %60 : i1 to i32
    %c0_i32_23 = arith.constant 0 : i32
    %62 = arith.cmpi ne, %61, %c0_i32_23 : i32
    scf.if %62 {
      %cst_26 = arith.constant 0.000000e+00 : f32
      %66 = vector.broadcast %cst_26 : f32 to vector<128x128xf32>
      %67 = arith.maximumf %59, %66 : vector<128x128xf32>
      %c0_27 = arith.constant 0 : index
      %c0_28 = arith.constant 0 : index
      %68 = vector.load %arg7[%c0_27, %c0_28] : memref<128x128xf32, #tpu.memory_space<vmem>>, vector<128x128xf32>
      tpu.vector_store %arg7[%c0_27, %c0_28], %67 {strides = array<i32>} : memref<128x128xf32, #tpu.memory_space<vmem>>, vector<128x128xf32>,
    } else {
    }
    %c4_i32_24 = arith.constant 4 : i32
    %63 = arith.cmpi eq, %arg0, %c4_i32_24 : i32
    %64 = arith.extui %63 : i1 to i32
    %c0_i32_25 = arith.constant 0 : i32
    %65 = arith.cmpi ne, %64, %c0_i32_25 : i32
    scf.if %65 {
      %c0_26 = arith.constant 0 : index
      %c0_27 = arith.constant 0 : index
      %66 = vector.load %arg7[%c0_26, %c0_27] : memref<128x128xf32, #tpu.memory_space<vmem>>, vector<128x128xf32>
      tpu.vector_store %arg7[%c0_26, %c0_27], %59 {strides = array<i32>} : memref<128x128xf32, #tpu.memory_space<vmem>>, vector<128x128xf32>,
    } else {
    }
    return
  }
  func.func @transform_0(%arg0: i32) -> (i32, i32) {
    %c0_i32 = arith.constant 0 : i32
    %c0_i32_0 = arith.constant 0 : i32
    %c0_i32_1 = arith.constant 0 : i32
    return %c0_i32, %c0_i32_0 : i32, i32
  }
  func.func @transform_1(%arg0: i32) -> (i32, i32) {
    %c0_i32 = arith.constant 0 : i32
    %c0_i32_0 = arith.constant 0 : i32
    %c0_i32_1 = arith.constant 0 : i32
    return %c0_i32, %c0_i32_0 : i32, i32
  }
  func.func @transform_2(%arg0: i32) -> (i32, i32, i32) {
    %c0_i32 = arith.constant 0 : i32
    %c0_i32_0 = arith.constant 0 : i32
    %c0_i32_1 = arith.constant 0 : i32
    return %arg0, %c0_i32, %c0_i32_0 : i32, i32, i32
  }
  func.func @transform_3(%arg0: i32) -> (i32, i32, i32) {
    %c0_i32 = arith.constant 0 : i32
    %c0_i32_0 = arith.constant 0 : i32
    %c0_i32_1 = arith.constant 0 : i32
    return %arg0, %c0_i32, %c0_i32_0 : i32, i32, i32
  }
  func.func @transform_4(%arg0: i32) -> (i32, i32, i32) {
    %c0_i32 = arith.constant 0 : i32
    %c0_i32_0 = arith.constant 0 : i32
    %c0_i32_1 = arith.constant 0 : i32
    return %arg0, %c0_i32, %c0_i32_0 : i32, i32, i32
  }
  func.func @transform_5(%arg0: i32) -> (i32, i32, i32) {
    %c0_i32 = arith.constant 0 : i32
    %c0_i32_0 = arith.constant 0 : i32
    %c0_i32_1 = arith.constant 0 : i32
    %c0_i32_2 = arith.constant 0 : i32
    return %c0_i32, %c0_i32_0, %c0_i32_1 : i32, i32, i32
  }
  func.func @transform_6(%arg0: i32) -> (i32, i32) {
    %c0_i32 = arith.constant 0 : i32
    %c0_i32_0 = arith.constant 0 : i32
    %c0_i32_1 = arith.constant 0 : i32
    return %c0_i32, %c0_i32_0 : i32, i32
  }
}

</mosaic_0001>

<llo_original>
// kernel: tpu_custom_call.1
$region0: #{tpu_custom_call.1}
  #allocation0 [shape = 'u32[]', space=smem, size = 0x4, offset = 0x4, fixed_abs, tag = 'smem constant byte address 0x4 - core index']
  #allocation1 [shape = 'u32[144,128]{1,0:T(1,128)}', space=vmem, size = 0x12000, scoped, tag = 'internal scratch']
  %s0 = inlined_call_operand.hbm [shape: bf16[128,128], index: 0, kind: input, shape index: {}]
  %s1 = inlined_call_operand.hbm [shape: f32[128,128], index: 1, kind: input, shape index: {}]
  %s2 = inlined_call_operand.hbm [shape: f32[5,128,128], index: 2, kind: input, shape index: {}]
  %s3 = inlined_call_operand.hbm [shape: bf16[5,128,128], index: 3, kind: input, shape index: {}]
  %s4 = inlined_call_operand.hbm [shape: bf16[5,128,128], index: 4, kind: input, shape index: {}]
  %s5 = inlined_call_operand.hbm [shape: f32[5,8,128], index: 5, kind: input, shape index: {}]
  %s6 = inlined_call_operand.hbm [shape: f32[128,128], index: 6, kind: output, shape index: {}]
  %s7 = sld [smem:[#allocation0]]
  $region93: #{tpu_custom_call.1} parent=0
    _
  %s9 = ssub.s32 1, %s7
  %s10 = scalar_select 0, %s9, %s7
  $region1: #{tpu_custom_call.1} parent=0
    #allocation2 [shape = 'u8[32768]{0}', space=vmem, size = 0x8000, scoped, tag = 'input window, operand 0, single buffered']
    #allocation3 [shape = 's32[2]{0}', space=sflag, size = 0x8, scoped, tag = 'scoped memory for tpu_custom_call.1']
    #allocation4 [shape = 's32[2]{0}', space=sflag, size = 0x8, scoped, tag = 'scoped memory for tpu_custom_call.1']
    #allocation5 [shape = 'u8[65536]{0}', space=vmem, size = 0x10000, scoped, tag = 'input window, operand 1, single buffered']
    #allocation6 [shape = 's32[1]{0}', space=sflag, size = 0x4, scoped, tag = 'scoped memory for tpu_custom_call.1']
    #allocation7 [shape = 'u8[131072]{0}', space=vmem, size = 0x20000, scoped, tag = 'input window, operand 2']
    #allocation8 [shape = 'u8[65536]{0}', space=vmem, size = 0x10000, scoped, tag = 'input window, operand 3']
    #allocation9 [shape = 'u8[65536]{0}', space=vmem, size = 0x10000, scoped, tag = 'input window, operand 4']
    #allocation10 [shape = 'u8[20480]{0}', space=vmem, size = 0x5000, scoped, tag = 'input window, operand 5, single buffered']
    #allocation11 [shape = 'u8[65536]{0}', space=vmem, size = 0x10000, scoped, tag = 'output window, operand 0, single buffered']
    %11 = vsyncpa [#allocation3], 0
    %12 = vsyncpa [#allocation6], 0
    %13 = vsyncpa [#allocation4], 0
    loop: start=0, step=1, limit=7
    $region2: #{tpu_custom_call.1} parent=1 // loop_pre_header
      _
    $region3: #{tpu_custom_call.1} parent=1 // loop_header
      %s15 = sphi 0, %s19
      %p16 = scmp.ge.s32.totalorder %s15, 7
      %s23 = sphi 0, %s23
      %s25 = sphi 0, %s23
      %s26 = sphi 0, %s25
      %s40 = sphi 0, %s26
      %s44 = sphi 0, %s44
      %s46 = sphi 0, %s44
      %s47 = sphi 0, %s46
      %s61 = sphi 0, %s47
      %s67 = sphi 0, %s69
      %s70 = sphi 0, %s67
      %s71 = sphi 0, %s70
      %s87 = sphi 0, %s71
      %s93 = sphi 0, %s95
      %s96 = sphi 0, %s93
      %s97 = sphi 0, %s96
      %s113 = sphi 0, %s97
      %s119 = sphi 0, %s121
      %s122 = sphi 0, %s119
      %s123 = sphi 0, %s122
      %s139 = sphi 0, %s123
      %s143 = sphi 0, %s143
      %s145 = sphi 0, %s143
      %s146 = sphi 0, %s145
      %s160 = sphi 0, %s146
      %s164 = sphi 0, %s164
      %s166 = sphi 0, %s164
      %s167 = sphi 0, %s166
      %s181 = sphi 0, %s167
    $region4: #{tpu_custom_call.1} parent=1 // loop_header_branch
      %18 = sbr.rel (%p16) target = $region8
    $region5: #{tpu_custom_call.1} parent=1 // loop_body
      %s20 = ssub.s32 %s15, 1
      %s21 = ssub.s32 %s15, 2
      %s22 = sadd.s32 %s15, 1
      %s24 = sadd.s32 %s23, 1
      %p27 = scmp.eq.s32.totalorder %s15, 4
      %p28 = scmp.ne.s32.totalorder %s23, %s25
      %p29 = scmp.eq.s32.totalorder %s15, 0
      %p30 = por %p28, %p29
      %p31 = scmp.ne.s32.totalorder %s23, %s25
      %p32 = scmp.eq.s32.totalorder %s20, 4
      %p33 = por %p31, %p32
      %p34 = scmp.ne.s32.totalorder %s25, %s26
      %p35 = scmp.eq.s32.totalorder %s20, 0
      %p36 = por %p34, %p35
      %p37 = scmp.ne.s32.totalorder %s25, %s26
      %p38 = scmp.eq.s32.totalorder %s21, 4
      %p39 = por %p37, %p38
      %p41 = scmp.ne.s32.totalorder %s26, %s40
      %p42 = scmp.eq.s32.totalorder %s21, 0
      %p43 = por %p41, %p42
      %s45 = sadd.s32 %s44, 1
      %p48 = scmp.eq.s32.totalorder %s15, 4
      %p49 = scmp.ne.s32.totalorder %s44, %s46
      %p50 = scmp.eq.s32.totalorder %s15, 0
      %p51 = por %p49, %p50
      %p52 = scmp.ne.s32.totalorder %s44, %s46
      %p53 = scmp.eq.s32.totalorder %s20, 4
      %p54 = por %p52, %p53
      %p55 = scmp.ne.s32.totalorder %s46, %s47
      %p56 = scmp.eq.s32.totalorder %s20, 0
      %p57 = por %p55, %p56
      %p58 = scmp.ne.s32.totalorder %s46, %s47
      %p59 = scmp.eq.s32.totalorder %s21, 4
      %p60 = por %p58, %p59
      %p62 = scmp.ne.s32.totalorder %s47, %s61
      %p63 = scmp.eq.s32.totalorder %s21, 0
      %p64 = por %p62, %p63
      %s65 = ssub.s32 %s15, %s22
      %p66 = scmp.eq.s32.totalorder %s65, 0
      %s68 = sadd.s32 %s67, 1
      %s69 = scalar_select %p66, %s67, %s68
      %p72 = pneg %p66
      %p73 = scmp.eq.s32.totalorder %s15, 4
      %p74 = por %p72, %p73
      %p75 = scmp.ne.s32.totalorder %s67, %s70
      %p76 = scmp.eq.s32.totalorder %s15, 0
      %p77 = por %p75, %p76
      %p78 = scmp.ne.s32.totalorder %s67, %s70
      %p79 = scmp.eq.s32.totalorder %s20, 4
      %p80 = por %p78, %p79
      %p81 = scmp.ne.s32.totalorder %s70, %s71
      %p82 = scmp.eq.s32.totalorder %s20, 0
      %p83 = por %p81, %p82
      %p84 = scmp.ne.s32.totalorder %s70, %s71
      %p85 = scmp.eq.s32.totalorder %s21, 4
      %p86 = por %p84, %p85
      %p88 = scmp.ne.s32.totalorder %s71, %s87
      %p89 = scmp.eq.s32.totalorder %s21, 0
      %p90 = por %p88, %p89
      %s91 = ssub.s32 %s15, %s22
      %p92 = scmp.eq.s32.totalorder %s91, 0
      %s94 = sadd.s32 %s93, 1
      %s95 = scalar_select %p92, %s93, %s94
      %p98 = pneg %p92
      %p99 = scmp.eq.s32.totalorder %s15, 4
      %p100 = por %p98, %p99
      %p101 = scmp.ne.s32.totalorder %s93, %s96
      %p102 = scmp.eq.s32.totalorder %s15, 0
      %p103 = por %p101, %p102
      %p104 = scmp.ne.s32.totalorder %s93, %s96
      %p105 = scmp.eq.s32.totalorder %s20, 4
      %p106 = por %p104, %p105
      %p107 = scmp.ne.s32.totalorder %s96, %s97
      %p108 = scmp.eq.s32.totalorder %s20, 0
      %p109 = por %p107, %p108
      %p110 = scmp.ne.s32.totalorder %s96, %s97
      %p111 = scmp.eq.s32.totalorder %s21, 4
      %p112 = por %p110, %p111
      %p114 = scmp.ne.s32.totalorder %s97, %s113
      %p115 = scmp.eq.s32.totalorder %s21, 0
      %p116 = por %p114, %p115
      %s117 = ssub.s32 %s15, %s22
      %p118 = scmp.eq.s32.totalorder %s117, 0
      %s120 = sadd.s32 %s119, 1
      %s121 = scalar_select %p118, %s119, %s120
      %p124 = pneg %p118
      %p125 = scmp.eq.s32.totalorder %s15, 4
      %p126 = por %p124, %p125
      %p127 = scmp.ne.s32.totalorder %s119, %s122
      %p128 = scmp.eq.s32.totalorder %s15, 0
      %p129 = por %p127, %p128
      %p130 = scmp.ne.s32.totalorder %s119, %s122
      %p131 = scmp.eq.s32.totalorder %s20, 4
      %p132 = por %p130, %p131
      %p133 = scmp.ne.s32.totalorder %s122, %s123
      %p134 = scmp.eq.s32.totalorder %s20, 0
      %p135 = por %p133, %p134
      %p136 = scmp.ne.s32.totalorder %s122, %s123
      %p137 = scmp.eq.s32.totalorder %s21, 4
      %p138 = por %p136, %p137
      %p140 = scmp.ne.s32.totalorder %s123, %s139
      %p141 = scmp.eq.s32.totalorder %s21, 0
      %p142 = por %p140, %p141
      %s144 = sadd.s32 %s143, 1
      %p147 = scmp.eq.s32.totalorder %s15, 4
      %p148 = scmp.ne.s32.totalorder %s143, %s145
      %p149 = scmp.eq.s32.totalorder %s15, 0
      %p150 = por %p148, %p149
      %p151 = scmp.ne.s32.totalorder %s143, %s145
      %p152 = scmp.eq.s32.totalorder %s20, 4
      %p153 = por %p151, %p152
      %p154 = scmp.ne.s32.totalorder %s145, %s146
      %p155 = scmp.eq.s32.totalorder %s20, 0
      %p156 = por %p154, %p155
      %p157 = scmp.ne.s32.totalorder %s145, %s146
      %p158 = scmp.eq.s32.totalorder %s21, 4
      %p159 = por %p157, %p158
      %p161 = scmp.ne.s32.totalorder %s146, %s160
      %p162 = scmp.eq.s32.totalorder %s21, 0
      %p163 = por %p161, %p162
      %s165 = sadd.s32 %s164, 1
      %p168 = scmp.eq.s32.totalorder %s15, 4
      %p169 = scmp.ne.s32.totalorder %s164, %s166
      %p170 = scmp.eq.s32.totalorder %s15, 0
      %p171 = por %p169, %p170
      %p172 = scmp.ne.s32.totalorder %s164, %s166
      %p173 = scmp.eq.s32.totalorder %s20, 4
      %p174 = por %p172, %p173
      %p175 = scmp.ne.s32.totalorder %s166, %s167
      %p176 = scmp.eq.s32.totalorder %s20, 0
      %p177 = por %p175, %p176
      %p178 = scmp.ne.s32.totalorder %s166, %s167
      %p179 = scmp.eq.s32.totalorder %s21, 4
      %p180 = por %p178, %p179
      %p182 = scmp.ne.s32.totalorder %s167, %s181
      %p183 = scmp.eq.s32.totalorder %s21, 0
      %p184 = por %p182, %p183
      %p185 = scmp.le.s32.totalorder 1, %s15
      %p186 = scmp.lt.s32.totalorder %s15, 6
      %p187 = pnand %p185, %p186
      %p188 = pneg %p187
      // Predicated region
      $region9: #{tpu_custom_call.1} parent=5 // pred_check
        _
      $region10: #{tpu_custom_call.1} parent=5 // pred_check_branch
        %190 = sbr.rel (%p187) target = $region12
      $region11: #{tpu_custom_call.1} parent=5 // pred_region
        %s191 = ssub.s32 %s15, 1
        // Predicated region
        $region13: #{tpu_custom_call.1} parent=11 // pred_check
          %p192 = pneg %p36
        $region14: #{tpu_custom_call.1} parent=11 // pred_check_branch
          %194 = sbr.rel (%p192) target = $region16
        $region15: #{tpu_custom_call.1} parent=11 // pred_region
          %s196 = ssub.s32 1024, 1024
          %197 = vsyncadd [#allocation3], %s196
          %s198 = sshll.u32 [#allocation2], 4
          %s199 = int_to_ptr.vmem [resolvable:$true] %s198
          %204 = dma.hbm_to_vmem [thread:$0]  %s0, 1024, %s199, [#allocation3], 64, 64, 4
        $region16: #{tpu_custom_call.1} parent=11 // pred_fallthru
          _
        // Predicated region
        $region17: #{tpu_custom_call.1} parent=11 // pred_check
          %p205 = pneg %p57
        $region18: #{tpu_custom_call.1} parent=11 // pred_check_branch
          %207 = sbr.rel (%p205) target = $region20
        $region19: #{tpu_custom_call.1} parent=11 // pred_region
          %s209 = ssub.s32 2048, 2048
          %210 = vsyncadd [#allocation6], %s209
          %s211 = sshll.u32 [#allocation5], 4
          %s212 = int_to_ptr.vmem [resolvable:$true] %s211
          %217 = dma.hbm_to_vmem [thread:$0]  %s1, 2048, %s212, [#allocation6], 128, 128, 8
        $region20: #{tpu_custom_call.1} parent=11 // pred_fallthru
          _
        // Predicated region
        $region21: #{tpu_custom_call.1} parent=11 // pred_check
          %p218 = pneg %p156
        $region22: #{tpu_custom_call.1} parent=11 // pred_check_branch
          %220 = sbr.rel (%p218) target = $region24
        $region23: #{tpu_custom_call.1} parent=11 // pred_region
          %s222 = ssub.s32 640, 640
          %223 = vsyncadd [#allocation6], %s222
          %s224 = sshll.u32 [#allocation10], 4
          %s225 = int_to_ptr.vmem [resolvable:$true] %s224
          %230 = dma.hbm_to_vmem [thread:$0]  %s5, 640, %s225, [#allocation6], 128, 128, 8
        $region24: #{tpu_custom_call.1} parent=11 // pred_fallthru
          _
      $region12: #{tpu_custom_call.1} parent=5 // pred_fallthru
        _
      %p231 = scmp.lt.s32.totalorder %s15, 5
      // Predicated region
      $region25: #{tpu_custom_call.1} parent=5 // pred_check
        %p232 = pneg %p231
      $region26: #{tpu_custom_call.1} parent=5 // pred_check_branch
        %234 = sbr.rel (%p232) target = $region28
      $region27: #{tpu_custom_call.1} parent=5 // pred_region
        // Predicated region
        $region29: #{tpu_custom_call.1} parent=27 // pred_check
          %p235 = pneg %p77
        $region30: #{tpu_custom_call.1} parent=27 // pred_check_branch
          %237 = sbr.rel (%p235) target = $region32
        $region31: #{tpu_custom_call.1} parent=27 // pred_region
          %s238 = sand.u32 %s15, 1
          %s239 = scalar_lea.sflag [#allocation3], %s238
          %s240 = sand.u32 %s67, 1
          %s241 = smul.addr %s240, 128
          %s242 = scalar_lea.vmem [#allocation7], %s241
          %s244 = ssub.s32 2048, 2048
          %245 = vsyncadd %s239, %s244
          %s246 = smul.addr %s15, 16
          %s247 = smul.addr %s246, 128
          %s248 = scalar_lea.hbm %s2, %s247
          %s249 = sshll.u32 %s242, 4
          %s250 = int_to_ptr.vmem [resolvable:$true] %s249
          %255 = dma.hbm_to_vmem [thread:$0]  %s248, 2048, %s250, %s239, 128, 128, 8
        $region32: #{tpu_custom_call.1} parent=27 // pred_fallthru
          _
        // Predicated region
        $region33: #{tpu_custom_call.1} parent=27 // pred_check
          %p256 = pneg %p103
        $region34: #{tpu_custom_call.1} parent=27 // pred_check_branch
          %258 = sbr.rel (%p256) target = $region36
        $region35: #{tpu_custom_call.1} parent=27 // pred_region
          %s259 = sand.u32 %s15, 1
          %s260 = scalar_lea.sflag [#allocation3], %s259
          %s261 = sand.u32 %s93, 1
          %s262 = smul.addr %s261, 64
          %s263 = scalar_lea.vmem [#allocation8], %s262
          %s265 = ssub.s32 1024, 1024
          %266 = vsyncadd %s260, %s265
          %s267 = smul.addr %s15, 16
          %s268 = smul.addr %s267, 64
          %s269 = scalar_lea.hbm %s3, %s268
          %s270 = sshll.u32 %s263, 4
          %s271 = int_to_ptr.vmem [resolvable:$true] %s270
          %276 = dma.hbm_to_vmem [thread:$0]  %s269, 1024, %s271, %s260, 64, 64, 4
        $region36: #{tpu_custom_call.1} parent=27 // pred_fallthru
          _
        // Predicated region
        $region37: #{tpu_custom_call.1} parent=27 // pred_check
          %p277 = pneg %p129
        $region38: #{tpu_custom_call.1} parent=27 // pred_check_branch
          %279 = sbr.rel (%p277) target = $region40
        $region39: #{tpu_custom_call.1} parent=27 // pred_region
          %s280 = sand.u32 %s15, 1
          %s281 = scalar_lea.sflag [#allocation3], %s280
          %s282 = sand.u32 %s119, 1
          %s283 = smul.addr %s282, 64
          %s284 = scalar_lea.vmem [#allocation9], %s283
          %s286 = ssub.s32 1024, 1024
          %287 = vsyncadd %s281, %s286
          %s288 = smul.addr %s15, 16
          %s289 = smul.addr %s288, 64
          %s290 = scalar_lea.hbm %s4, %s289
          %s291 = sshll.u32 %s284, 4
          %s292 = int_to_ptr.vmem [resolvable:$true] %s291
          %297 = dma.hbm_to_vmem [thread:$0]  %s290, 1024, %s292, %s281, 64, 64, 4
        $region40: #{tpu_custom_call.1} parent=27 // pred_fallthru
          _
      $region28: #{tpu_custom_call.1} parent=5 // pred_fallthru
        _
      %p298 = scmp.le.s32.totalorder 1, %s15
      %p299 = scmp.lt.s32.totalorder %s15, 6
      %p300 = pnand %p298, %p299
      %p301 = pneg %p300
      // Predicated region
      $region41: #{tpu_custom_call.1} parent=5 // pred_check
        _
      $region42: #{tpu_custom_call.1} parent=5 // pred_check_branch
        %303 = sbr.rel (%p300) target = $region44
      $region43: #{tpu_custom_call.1} parent=5 // pred_region
        %s304 = ssub.s32 %s15, 1
        // Predicated region
        $region45: #{tpu_custom_call.1} parent=43 // pred_check
          %p305 = pneg %p36
        $region46: #{tpu_custom_call.1} parent=43 // pred_check_branch
          %307 = sbr.rel (%p305) target = $region48
        $region47: #{tpu_custom_call.1} parent=43 // pred_region
          %308 = dma.done [#allocation3], 1024
        $region48: #{tpu_custom_call.1} parent=43 // pred_fallthru
          _
        // Predicated region
        $region49: #{tpu_custom_call.1} parent=43 // pred_check
          %p309 = pneg %p57
        $region50: #{tpu_custom_call.1} parent=43 // pred_check_branch
          %311 = sbr.rel (%p309) target = $region52
        $region51: #{tpu_custom_call.1} parent=43 // pred_region
          %312 = dma.done [#allocation6], 2048
        $region52: #{tpu_custom_call.1} parent=43 // pred_fallthru
          _
        %s313 = sand.u32 %s20, 1
        %s314 = scalar_lea.sflag [#allocation3], %s313
        %s315 = sand.u32 %s70, 1
        %s316 = smul.addr %s315, 128
        %s317 = scalar_lea.vmem [#allocation7], %s316
        // Predicated region
        $region53: #{tpu_custom_call.1} parent=43 // pred_check
          %p318 = pneg %p83
        $region54: #{tpu_custom_call.1} parent=43 // pred_check_branch
          %320 = sbr.rel (%p318) target = $region56
        $region55: #{tpu_custom_call.1} parent=43 // pred_region
          %321 = dma.done %s314, 2048
        $region56: #{tpu_custom_call.1} parent=43 // pred_fallthru
          _
        %s322 = sand.u32 %s20, 1
        %s323 = scalar_lea.sflag [#allocation3], %s322
        %s324 = sand.u32 %s96, 1
        %s325 = smul.addr %s324, 64
        %s326 = scalar_lea.vmem [#allocation8], %s325
        // Predicated region
        $region57: #{tpu_custom_call.1} parent=43 // pred_check
          %p327 = pneg %p109
        $region58: #{tpu_custom_call.1} parent=43 // pred_check_branch
          %329 = sbr.rel (%p327) target = $region60
        $region59: #{tpu_custom_call.1} parent=43 // pred_region
          %330 = dma.done %s323, 1024
        $region60: #{tpu_custom_call.1} parent=43 // pred_fallthru
          _
        %s331 = sand.u32 %s20, 1
        %s332 = scalar_lea.sflag [#allocation3], %s331
        %s333 = sand.u32 %s122, 1
        %s334 = smul.addr %s333, 64
        %s335 = scalar_lea.vmem [#allocation9], %s334
        // Predicated region
        $region61: #{tpu_custom_call.1} parent=43 // pred_check
          %p336 = pneg %p135
        $region62: #{tpu_custom_call.1} parent=43 // pred_check_branch
          %338 = sbr.rel (%p336) target = $region64
        $region63: #{tpu_custom_call.1} parent=43 // pred_region
          %339 = dma.done %s332, 1024
        $region64: #{tpu_custom_call.1} parent=43 // pred_fallthru
          _
        // Predicated region
        $region65: #{tpu_custom_call.1} parent=43 // pred_check
          %p340 = pneg %p156
        $region66: #{tpu_custom_call.1} parent=43 // pred_check_branch
          %342 = sbr.rel (%p340) target = $region68
        $region67: #{tpu_custom_call.1} parent=43 // pred_region
          %343 = dma.done [#allocation6], 640
        $region68: #{tpu_custom_call.1} parent=43 // pred_fallthru
          _
        %p344 = pneg %p36
        %p345 = pneg %p33
        %p346 = pneg %p57
        %p347 = pneg %p54
        %s348 = sand.u32 %s20, 1
        %s349 = scalar_lea.sflag [#allocation3], %s348
        %s350 = sand.u32 %s70, 1
        %s351 = smul.addr %s350, 128
        %s352 = scalar_lea.vmem [#allocation7], %s351
        %p353 = pneg %p83
        %p354 = pneg %p80
        %s355 = sand.u32 %s20, 1
        %s356 = scalar_lea.sflag [#allocation3], %s355
        %s357 = sand.u32 %s96, 1
        %s358 = smul.addr %s357, 64
        %s359 = scalar_lea.vmem [#allocation8], %s358
        %p360 = pneg %p109
        %p361 = pneg %p106
        %s362 = sand.u32 %s20, 1
        %s363 = scalar_lea.sflag [#allocation3], %s362
        %s364 = sand.u32 %s122, 1
        %s365 = smul.addr %s364, 64
        %s366 = scalar_lea.vmem [#allocation9], %s365
        %p367 = pneg %p135
        %p368 = pneg %p132
        %p369 = pneg %p156
        %p370 = pneg %p153
        %p371 = pneg %p177
        %p372 = pneg %p174
        %p374 = scmp.eq.s32.totalorder %s20, 0
        // Predicated region
        $region69: #{tpu_custom_call.1} parent=43 // pred_check
          %p375 = pneg %p374
        $region70: #{tpu_custom_call.1} parent=43 // pred_check_branch
          %377 = sbr.rel (%p375) target = $region72
        $region71: #{tpu_custom_call.1} parent=43 // pred_region
          %v378 = vld [vmem:[#allocation5] sm:$0xff]
          %v379 = vld [vmem:[#allocation5 + $0x8] sm:$0xff]
          %v380 = vld [vmem:[#allocation5 + $0x10] sm:$0xff]
          %v381 = vld [vmem:[#allocation5 + $0x18] sm:$0xff]
          %v382 = vld [vmem:[#allocation5 + $0x20] sm:$0xff]
          %v383 = vld [vmem:[#allocation5 + $0x28] sm:$0xff]
          %v384 = vld [vmem:[#allocation5 + $0x30] sm:$0xff]
          %v385 = vld [vmem:[#allocation5 + $0x38] sm:$0xff]
          %v386 = vld [vmem:[#allocation5 + $0x40] sm:$0xff]
          %v387 = vld [vmem:[#allocation5 + $0x48] sm:$0xff]
          %v388 = vld [vmem:[#allocation5 + $0x50] sm:$0xff]
          %v389 = vld [vmem:[#allocation5 + $0x58] sm:$0xff]
          %v390 = vld [vmem:[#allocation5 + $0x60] sm:$0xff]
          %v391 = vld [vmem:[#allocation5 + $0x68] sm:$0xff]
          %v392 = vld [vmem:[#allocation5 + $0x70] sm:$0xff]
          %v393 = vld [vmem:[#allocation5 + $0x78] sm:$0xff]
          %394 = vst [vmem:[#allocation11] sm:$0xff] %v378
          %395 = vst [vmem:[#allocation11 + $0x8] sm:$0xff] %v379
          %396 = vst [vmem:[#allocation11 + $0x10] sm:$0xff] %v380
          %397 = vst [vmem:[#allocation11 + $0x18] sm:$0xff] %v381
          %398 = vst [vmem:[#allocation11 + $0x20] sm:$0xff] %v382
          %399 = vst [vmem:[#allocation11 + $0x28] sm:$0xff] %v383
          %400 = vst [vmem:[#allocation11 + $0x30] sm:$0xff] %v384
          %401 = vst [vmem:[#allocation11 + $0x38] sm:$0xff] %v385
          %402 = vst [vmem:[#allocation11 + $0x40] sm:$0xff] %v386
          %403 = vst [vmem:[#allocation11 + $0x48] sm:$0xff] %v387
          %404 = vst [vmem:[#allocation11 + $0x50] sm:$0xff] %v388
          %405 = vst [vmem:[#allocation11 + $0x58] sm:$0xff] %v389
          %406 = vst [vmem:[#allocation11 + $0x60] sm:$0xff] %v390
          %407 = vst [vmem:[#allocation11 + $0x68] sm:$0xff] %v391
          %408 = vst [vmem:[#allocation11 + $0x70] sm:$0xff] %v392
          %409 = vst [vmem:[#allocation11 + $0x78] sm:$0xff] %v393
        $region72: #{tpu_custom_call.1} parent=43 // pred_fallthru
          _
        %v410 = vld [vmem:[#allocation11] sm:$0xff]
        %v411 = vld [vmem:[#allocation11 + $0x8] sm:$0xff]
        %v412 = vld [vmem:[#allocation11 + $0x10] sm:$0xff]
        %v413 = vld [vmem:[#allocation11 + $0x18] sm:$0xff]
        %v414 = vld [vmem:[#allocation11 + $0x20] sm:$0xff]
        %v415 = vld [vmem:[#allocation11 + $0x28] sm:$0xff]
        %v416 = vld [vmem:[#allocation11 + $0x30] sm:$0xff]
        %v417 = vld [vmem:[#allocation11 + $0x38] sm:$0xff]
        %v418 = vld [vmem:[#allocation11 + $0x40] sm:$0xff]
        %v419 = vld [vmem:[#allocation11 + $0x48] sm:$0xff]
        %v420 = vld [vmem:[#allocation11 + $0x50] sm:$0xff]
        %v421 = vld [vmem:[#allocation11 + $0x58] sm:$0xff]
        %v422 = vld [vmem:[#allocation11 + $0x60] sm:$0xff]
        %v423 = vld [vmem:[#allocation11 + $0x68] sm:$0xff]
        %v424 = vld [vmem:[#allocation11 + $0x70] sm:$0xff]
        %v425 = vld [vmem:[#allocation11 + $0x78] sm:$0xff]
        %v426 = vld [vmem:[#allocation2] sm:$0xf]
        %v427 = vld [vmem:[#allocation2 + $0x4] sm:$0xf]
        %v428 = vld [vmem:[#allocation2 + $0x8] sm:$0xf]
        %v429 = vld [vmem:[#allocation2 + $0xc] sm:$0xf]
        %v430 = vld [vmem:[#allocation2 + $0x10] sm:$0xf]
        %v431 = vld [vmem:[#allocation2 + $0x14] sm:$0xf]
        %v432 = vld [vmem:[#allocation2 + $0x18] sm:$0xf]
        %v433 = vld [vmem:[#allocation2 + $0x1c] sm:$0xf]
        %v434 = vld [vmem:[#allocation2 + $0x20] sm:$0xf]
        %v435 = vld [vmem:[#allocation2 + $0x24] sm:$0xf]
        %v436 = vld [vmem:[#allocation2 + $0x28] sm:$0xf]
        %v437 = vld [vmem:[#allocation2 + $0x2c] sm:$0xf]
        %v438 = vld [vmem:[#allocation2 + $0x30] sm:$0xf]
        %v439 = vld [vmem:[#allocation2 + $0x34] sm:$0xf]
        %v440 = vld [vmem:[#allocation2 + $0x38] sm:$0xf]
        %v441 = vld [vmem:[#allocation2 + $0x3c] sm:$0xf]
        %v442 = vpack.c.bf16 %v411, %v410
        %v443 = vpack.c.bf16 %v413, %v412
        %v444 = vpack.c.bf16 %v415, %v414
        %v445 = vpack.c.bf16 %v417, %v416
        %v446 = vpack.c.bf16 %v419, %v418
        %v447 = vpack.c.bf16 %v421, %v420
        %v448 = vpack.c.bf16 %v423, %v422
        %v449 = vpack.c.bf16 %v425, %v424
        %v450 = vld [vmem:[%s317] sm:$0xff]
        %v451 = vld [vmem:[%s317 + $0x8] sm:$0xff]
        %v452 = vld [vmem:[%s317 + $0x10] sm:$0xff]
        %v453 = vld [vmem:[%s317 + $0x18] sm:$0xff]
        %v454 = vld [vmem:[%s317 + $0x20] sm:$0xff]
        %v455 = vld [vmem:[%s317 + $0x28] sm:$0xff]
        %v456 = vld [vmem:[%s317 + $0x30] sm:$0xff]
        %v457 = vld [vmem:[%s317 + $0x38] sm:$0xff]
        %v458 = vld [vmem:[%s317 + $0x40] sm:$0xff]
        %v459 = vld [vmem:[%s317 + $0x48] sm:$0xff]
        %v460 = vld [vmem:[%s317 + $0x50] sm:$0xff]
        %v461 = vld [vmem:[%s317 + $0x58] sm:$0xff]
        %v462 = vld [vmem:[%s317 + $0x60] sm:$0xff]
        %v463 = vld [vmem:[%s317 + $0x68] sm:$0xff]
        %v464 = vld [vmem:[%s317 + $0x70] sm:$0xff]
        %v465 = vld [vmem:[%s317 + $0x78] sm:$0xff]
        %v482 = vunpack.c.l.b16 %v426
        %v483 = vunpack.c.l.b16 %v427
        %v484 = vunpack.c.l.b16 %v428
        %v485 = vunpack.c.l.b16 %v429
        %v486 = vunpack.c.l.b16 %v430
        %v487 = vunpack.c.l.b16 %v431
        %v488 = vunpack.c.l.b16 %v432
        %v489 = vunpack.c.l.b16 %v433
        %v490 = vunpack.c.l.b16 %v434
        %v491 = vunpack.c.l.b16 %v435
        %v492 = vunpack.c.l.b16 %v436
        %v493 = vunpack.c.l.b16 %v437
        %v494 = vunpack.c.l.b16 %v438
        %v495 = vunpack.c.l.b16 %v439
        %v496 = vunpack.c.l.b16 %v440
        %v497 = vunpack.c.l.b16 %v441
        %v498 = vpack.c.b16 %v483, %v482
        %v499 = vpack.c.b16 %v485, %v484
        %v500 = vpack.c.b16 %v487, %v486
        %v501 = vpack.c.b16 %v489, %v488
        %v502 = vpack.c.b16 %v491, %v490
        %v503 = vpack.c.b16 %v493, %v492
        %v504 = vpack.c.b16 %v495, %v494
        %v505 = vpack.c.b16 %v497, %v496
        %514 = vmatprep.subr.bf16.mxu0 0
        %515 = vmatpush1.bf16.msra.mxu0 %v449
        %516 = vmatprep.subr.bf16.mxu0 0
        %517 = vmatpush1.bf16.msra.mxu0 %v448
        %518 = vmatprep.subr.bf16.mxu0 0
        %519 = vmatpush1.bf16.msra.mxu0 %v447
        %520 = vmatprep.subr.bf16.mxu0 0
        %521 = vmatpush1.bf16.msra.mxu0 %v446
        %522 = vmatprep.subr.bf16.mxu0 0
        %523 = vmatpush1.bf16.msra.mxu0 %v445
        %524 = vmatprep.subr.bf16.mxu0 0
        %525 = vmatpush1.bf16.msra.mxu0 %v444
        %526 = vmatprep.subr.bf16.mxu0 0
        %527 = vmatpush1.bf16.msra.mxu0 %v443
        %528 = vmatprep.subr.bf16.mxu0 0
        %529 = vmatpush1.bf16.msra.mxu0 %v442
        %530 = vmatprep.subr.bf16.mxu0 0
        %531 = vmatpush2.bf16.msra.mxu0 0
        %532 = vmatprep.subr.bf16.mxu0 0
        %533 = vmatpush2.bf16.msra.mxu0 0
        %534 = vmatprep.subr.bf16.mxu0 0
        %535 = vmatpush2.bf16.msra.mxu0 0
        %536 = vmatprep.subr.bf16.mxu0 0
        %537 = vmatpush2.bf16.msra.mxu0 0
        %538 = vmatprep.subr.bf16.mxu0 0
        %539 = vmatpush2.bf16.msra.mxu0 0
        %540 = vmatprep.subr.bf16.mxu0 0
        %541 = vmatpush2.bf16.msra.mxu0 0
        %542 = vmatprep.subr.bf16.mxu0 0
        %543 = vmatpush2.bf16.msra.mxu0 0
        %544 = vmatprep.subr.bf16.mxu0 0
        %545 = vmatpush2.bf16.msra.mxu0 0
        %546 = vmatprep.mubr.bf16.mxu0 0
        %547 = vmatmul.mubr.bf16.gmra.mxu0 %v498
        %v548 = vpop.f32.mrf.mxu0
        %v549 = vadd.f32 %v450, %v548
        %v550 = vpop.f32.mrf.mxu0
        %v551 = vpop.f32.mrf.mxu0
        %v552 = vadd.f32 %v451, %v551
        %v553 = vpop.f32.mrf.mxu0
        %554 = vmatprep.mubr.bf16.mxu0 0
        %555 = vmatmul.mubr.bf16.gmra.mxu0 %v499
        %v556 = vpop.f32.mrf.mxu0
        %v557 = vadd.f32 %v452, %v556
        %v558 = vpop.f32.mrf.mxu0
        %v559 = vpop.f32.mrf.mxu0
        %v560 = vadd.f32 %v453, %v559
        %v561 = vpop.f32.mrf.mxu0
        %562 = vmatprep.mubr.bf16.mxu0 0
        %563 = vmatmul.mubr.bf16.gmra.mxu0 %v500
        %v564 = vpop.f32.mrf.mxu0
        %v565 = vadd.f32 %v454, %v564
        %v566 = vpop.f32.mrf.mxu0
        %v567 = vpop.f32.mrf.mxu0
        %v568 = vadd.f32 %v455, %v567
        %v569 = vpop.f32.mrf.mxu0
        %570 = vmatprep.mubr.bf16.mxu0 0
        %571 = vmatmul.mubr.bf16.gmra.mxu0 %v501
        %v572 = vpop.f32.mrf.mxu0
        %v573 = vadd.f32 %v456, %v572
        %v574 = vpop.f32.mrf.mxu0
        %v575 = vpop.f32.mrf.mxu0
        %v576 = vadd.f32 %v457, %v575
        %v577 = vpop.f32.mrf.mxu0
        %578 = vmatprep.mubr.bf16.mxu0 0
        %579 = vmatmul.mubr.bf16.gmra.mxu0 %v502
        %v580 = vpop.f32.mrf.mxu0
        %v581 = vadd.f32 %v458, %v580
        %v582 = vpop.f32.mrf.mxu0
        %v583 = vpop.f32.mrf.mxu0
        %v584 = vadd.f32 %v459, %v583
        %v585 = vpop.f32.mrf.mxu0
        %586 = vmatprep.mubr.bf16.mxu0 0
        %587 = vmatmul.mubr.bf16.gmra.mxu0 %v503
        %v588 = vpop.f32.mrf.mxu0
        %v589 = vadd.f32 %v460, %v588
        %v590 = vpop.f32.mrf.mxu0
        %v591 = vpop.f32.mrf.mxu0
        %v592 = vadd.f32 %v461, %v591
        %v593 = vpop.f32.mrf.mxu0
        %594 = vmatprep.mubr.bf16.mxu0 0
        %595 = vmatmul.mubr.bf16.gmra.mxu0 %v504
        %v596 = vpop.f32.mrf.mxu0
        %v597 = vadd.f32 %v462, %v596
        %v598 = vpop.f32.mrf.mxu0
        %v599 = vpop.f32.mrf.mxu0
        %v600 = vadd.f32 %v463, %v599
        %v601 = vpop.f32.mrf.mxu0
        %602 = vmatprep.mubr.bf16.mxu0 0
        %603 = vmatmul.mubr.bf16.gmra.mxu0 %v505
        %v604 = vpop.f32.mrf.mxu0
        %v605 = vadd.f32 %v464, %v604
        %v606 = vpop.f32.mrf.mxu0
        %v607 = vpop.f32.mrf.mxu0
        %v608 = vadd.f32 %v465, %v607
        %v609 = vpop.f32.mrf.mxu0
        %610 = vdwg.mxu0
        %s611 = smul.u32 %s20, 8
        %s612 = scalar_lea.vmem [#allocation10], %s611
        %v613 = vld [vmem:[%s612] sm:$0xff]
        %v614 = vpack.c.bf16 %v552, %v549
        %v615 = vpack.c.bf16 %v560, %v557
        %v616 = vpack.c.bf16 %v568, %v565
        %v617 = vpack.c.bf16 %v576, %v573
        %v618 = vpack.c.bf16 %v584, %v581
        %v619 = vpack.c.bf16 %v592, %v589
        %v620 = vpack.c.bf16 %v600, %v597
        %v621 = vpack.c.bf16 %v608, %v605
        %v622 = vld [vmem:[%s326] sm:$0xf]
        %v623 = vld [vmem:[%s326 + $0x4] sm:$0xf]
        %v624 = vld [vmem:[%s326 + $0x8] sm:$0xf]
        %v625 = vld [vmem:[%s326 + $0xc] sm:$0xf]
        %v626 = vld [vmem:[%s326 + $0x10] sm:$0xf]
        %v627 = vld [vmem:[%s326 + $0x14] sm:$0xf]
        %v628 = vld [vmem:[%s326 + $0x18] sm:$0xf]
        %v629 = vld [vmem:[%s326 + $0x1c] sm:$0xf]
        %v630 = vld [vmem:[%s326 + $0x20] sm:$0xf]
        %v631 = vld [vmem:[%s326 + $0x24] sm:$0xf]
        %v632 = vld [vmem:[%s326 + $0x28] sm:$0xf]
        %v633 = vld [vmem:[%s326 + $0x2c] sm:$0xf]
        %v634 = vld [vmem:[%s326 + $0x30] sm:$0xf]
        %v635 = vld [vmem:[%s326 + $0x34] sm:$0xf]
        %v636 = vld [vmem:[%s326 + $0x38] sm:$0xf]
        %v637 = vld [vmem:[%s326 + $0x3c] sm:$0xf]
        %v638 = vlaneseq
        %v639 = vshrl.u32 %v638, 7
        %v640 = vsub.s32 0, %v639
        %v641 = vrot.slane %v613, %v640
        %v658 = vunpack.c.l.b16 %v622
        %v659 = vunpack.c.l.b16 %v623
        %v660 = vunpack.c.l.b16 %v624
        %v661 = vunpack.c.l.b16 %v625
        %v662 = vunpack.c.l.b16 %v626
        %v663 = vunpack.c.l.b16 %v627
        %v664 = vunpack.c.l.b16 %v628
        %v665 = vunpack.c.l.b16 %v629
        %v666 = vunpack.c.l.b16 %v630
        %v667 = vunpack.c.l.b16 %v631
        %v668 = vunpack.c.l.b16 %v632
        %v669 = vunpack.c.l.b16 %v633
        %v670 = vunpack.c.l.b16 %v634
        %v671 = vunpack.c.l.b16 %v635
        %v672 = vunpack.c.l.b16 %v636
        %v673 = vunpack.c.l.b16 %v637
        %v674 = vpack.c.b16 %v659, %v658
        %v675 = vpack.c.b16 %v661, %v660
        %v676 = vpack.c.b16 %v663, %v662
        %v677 = vpack.c.b16 %v665, %v664
        %v678 = vpack.c.b16 %v667, %v666
        %v679 = vpack.c.b16 %v669, %v668
        %v680 = vpack.c.b16 %v671, %v670
        %v681 = vpack.c.b16 %v673, %v672
        %690 = vmatprep.subr.bf16.mxu0 0
        %691 = vmatpush1.bf16.msra.mxu0 %v681
        %692 = vmatprep.subr.bf16.mxu0 0
        %693 = vmatpush1.bf16.msra.mxu0 %v680
        %694 = vmatprep.subr.bf16.mxu0 0
        %695 = vmatpush1.bf16.msra.mxu0 %v679
        %696 = vmatprep.subr.bf16.mxu0 0
        %697 = vmatpush1.bf16.msra.mxu0 %v678
        %698 = vmatprep.subr.bf16.mxu0 0
        %699 = vmatpush1.bf16.msra.mxu0 %v677
        %700 = vmatprep.subr.bf16.mxu0 0
        %701 = vmatpush1.bf16.msra.mxu0 %v676
        %702 = vmatprep.subr.bf16.mxu0 0
        %703 = vmatpush1.bf16.msra.mxu0 %v675
        %704 = vmatprep.subr.bf16.mxu0 0
        %705 = vmatpush1.bf16.msra.mxu0 %v674
        %706 = vmatprep.subr.bf16.mxu0 0
        %707 = vmatpush2.bf16.msra.mxu0 0
        %708 = vmatprep.subr.bf16.mxu0 0
        %709 = vmatpush2.bf16.msra.mxu0 0
        %710 = vmatprep.subr.bf16.mxu0 0
        %711 = vmatpush2.bf16.msra.mxu0 0
        %712 = vmatprep.subr.bf16.mxu0 0
        %713 = vmatpush2.bf16.msra.mxu0 0
        %714 = vmatprep.subr.bf16.mxu0 0
        %715 = vmatpush2.bf16.msra.mxu0 0
        %716 = vmatprep.subr.bf16.mxu0 0
        %717 = vmatpush2.bf16.msra.mxu0 0
        %718 = vmatprep.subr.bf16.mxu0 0
        %719 = vmatpush2.bf16.msra.mxu0 0
        %720 = vmatprep.subr.bf16.mxu0 0
        %721 = vmatpush2.bf16.msra.mxu0 0
        %722 = vmatprep.mubr.bf16.mxu0 0
        %723 = vmatmul.mubr.bf16.gmra.mxu0 %v614
        %v724 = vpop.f32.mrf.mxu0
        %v725 = vadd.f32 %v641, %v724
        %v726 = vpop.f32.mrf.mxu0
        %v727 = vpop.f32.mrf.mxu0
        %v728 = vadd.f32 %v641, %v727
        %v729 = vpop.f32.mrf.mxu0
        %730 = vmatprep.mubr.bf16.mxu0 0
        %731 = vmatmul.mubr.bf16.gmra.mxu0 %v615
        %v732 = vpop.f32.mrf.mxu0
        %v733 = vadd.f32 %v641, %v732
        %v734 = vpop.f32.mrf.mxu0
        %v735 = vpop.f32.mrf.mxu0
        %v736 = vadd.f32 %v641, %v735
        %v737 = vpop.f32.mrf.mxu0
        %738 = vmatprep.mubr.bf16.mxu0 0
        %739 = vmatmul.mubr.bf16.gmra.mxu0 %v616
        %v740 = vpop.f32.mrf.mxu0
        %v741 = vadd.f32 %v641, %v740
        %v742 = vpop.f32.mrf.mxu0
        %v743 = vpop.f32.mrf.mxu0
        %v744 = vadd.f32 %v641, %v743
        %v745 = vpop.f32.mrf.mxu0
        %746 = vmatprep.mubr.bf16.mxu0 0
        %747 = vmatmul.mubr.bf16.gmra.mxu0 %v617
        %v748 = vpop.f32.mrf.mxu0
        %v749 = vadd.f32 %v641, %v748
        %v750 = vpop.f32.mrf.mxu0
        %v751 = vpop.f32.mrf.mxu0
        %v752 = vadd.f32 %v641, %v751
        %v753 = vpop.f32.mrf.mxu0
        %754 = vmatprep.mubr.bf16.mxu0 0
        %755 = vmatmul.mubr.bf16.gmra.mxu0 %v618
        %v756 = vpop.f32.mrf.mxu0
        %v757 = vadd.f32 %v641, %v756
        %v758 = vpop.f32.mrf.mxu0
        %v759 = vpop.f32.mrf.mxu0
        %v760 = vadd.f32 %v641, %v759
        %v761 = vpop.f32.mrf.mxu0
        %762 = vmatprep.mubr.bf16.mxu0 0
        %763 = vmatmul.mubr.bf16.gmra.mxu0 %v619
        %v764 = vpop.f32.mrf.mxu0
        %v765 = vadd.f32 %v641, %v764
        %v766 = vpop.f32.mrf.mxu0
        %v767 = vpop.f32.mrf.mxu0
        %v768 = vadd.f32 %v641, %v767
        %v769 = vpop.f32.mrf.mxu0
        %770 = vmatprep.mubr.bf16.mxu0 0
        %771 = vmatmul.mubr.bf16.gmra.mxu0 %v620
        %v772 = vpop.f32.mrf.mxu0
        %v773 = vadd.f32 %v641, %v772
        %v774 = vpop.f32.mrf.mxu0
        %v775 = vpop.f32.mrf.mxu0
        %v776 = vadd.f32 %v641, %v775
        %v777 = vpop.f32.mrf.mxu0
        %778 = vmatprep.mubr.bf16.mxu0 0
        %779 = vmatmul.mubr.bf16.gmra.mxu0 %v621
        %v780 = vpop.f32.mrf.mxu0
        %v781 = vadd.f32 %v641, %v780
        %v782 = vpop.f32.mrf.mxu0
        %v783 = vpop.f32.mrf.mxu0
        %v784 = vadd.f32 %v641, %v783
        %v785 = vpop.f32.mrf.mxu0
        %786 = vdwg.mxu0
        %v787 = vmax.f32 %v725, 0.0
        %v788 = vmax.f32 %v728, 0.0
        %v789 = vmax.f32 %v733, 0.0
        %v790 = vmax.f32 %v736, 0.0
        %v791 = vmax.f32 %v741, 0.0
        %v792 = vmax.f32 %v744, 0.0
        %v793 = vmax.f32 %v749, 0.0
        %v794 = vmax.f32 %v752, 0.0
        %v795 = vmax.f32 %v757, 0.0
        %v796 = vmax.f32 %v760, 0.0
        %v797 = vmax.f32 %v765, 0.0
        %v798 = vmax.f32 %v768, 0.0
        %v799 = vmax.f32 %v773, 0.0
        %v800 = vmax.f32 %v776, 0.0
        %v801 = vmax.f32 %v781, 0.0
        %v802 = vmax.f32 %v784, 0.0
        %v803 = vpack.c.bf16 %v788, %v787
        %v804 = vpack.c.bf16 %v790, %v789
        %v805 = vpack.c.bf16 %v792, %v791
        %v806 = vpack.c.bf16 %v794, %v793
        %v807 = vpack.c.bf16 %v796, %v795
        %v808 = vpack.c.bf16 %v798, %v797
        %v809 = vpack.c.bf16 %v800, %v799
        %v810 = vpack.c.bf16 %v802, %v801
        %v811 = vld [vmem:[%s335] sm:$0xf]
        %v812 = vld [vmem:[%s335 + $0x4] sm:$0xf]
        %v813 = vld [vmem:[%s335 + $0x8] sm:$0xf]
        %v814 = vld [vmem:[%s335 + $0xc] sm:$0xf]
        %v815 = vld [vmem:[%s335 + $0x10] sm:$0xf]
        %v816 = vld [vmem:[%s335 + $0x14] sm:$0xf]
        %v817 = vld [vmem:[%s335 + $0x18] sm:$0xf]
        %v818 = vld [vmem:[%s335 + $0x1c] sm:$0xf]
        %v819 = vld [vmem:[%s335 + $0x20] sm:$0xf]
        %v820 = vld [vmem:[%s335 + $0x24] sm:$0xf]
        %v821 = vld [vmem:[%s335 + $0x28] sm:$0xf]
        %v822 = vld [vmem:[%s335 + $0x2c] sm:$0xf]
        %v823 = vld [vmem:[%s335 + $0x30] sm:$0xf]
        %v824 = vld [vmem:[%s335 + $0x34] sm:$0xf]
        %v825 = vld [vmem:[%s335 + $0x38] sm:$0xf]
        %v826 = vld [vmem:[%s335 + $0x3c] sm:$0xf]
        %v827 = vlaneseq
        %v828 = vshrl.u32 %v827, 7
        %v829 = vsub.s32 1, %v828
        %v830 = vrot.slane %v613, %v829
        %v847 = vunpack.c.l.b16 %v811
        %v848 = vunpack.c.l.b16 %v812
        %v849 = vunpack.c.l.b16 %v813
        %v850 = vunpack.c.l.b16 %v814
        %v851 = vunpack.c.l.b16 %v815
        %v852 = vunpack.c.l.b16 %v816
        %v853 = vunpack.c.l.b16 %v817
        %v854 = vunpack.c.l.b16 %v818
        %v855 = vunpack.c.l.b16 %v819
        %v856 = vunpack.c.l.b16 %v820
        %v857 = vunpack.c.l.b16 %v821
        %v858 = vunpack.c.l.b16 %v822
        %v859 = vunpack.c.l.b16 %v823
        %v860 = vunpack.c.l.b16 %v824
        %v861 = vunpack.c.l.b16 %v825
        %v862 = vunpack.c.l.b16 %v826
        %v863 = vpack.c.b16 %v848, %v847
        %v864 = vpack.c.b16 %v850, %v849
        %v865 = vpack.c.b16 %v852, %v851
        %v866 = vpack.c.b16 %v854, %v853
        %v867 = vpack.c.b16 %v856, %v855
        %v868 = vpack.c.b16 %v858, %v857
        %v869 = vpack.c.b16 %v860, %v859
        %v870 = vpack.c.b16 %v862, %v861
        %879 = vmatprep.subr.bf16.mxu0 0
        %880 = vmatpush1.bf16.msra.mxu0 %v870
        %881 = vmatprep.subr.bf16.mxu0 0
        %882 = vmatpush1.bf16.msra.mxu0 %v869
        %883 = vmatprep.subr.bf16.mxu0 0
        %884 = vmatpush1.bf16.msra.mxu0 %v868
        %885 = vmatprep.subr.bf16.mxu0 0
        %886 = vmatpush1.bf16.msra.mxu0 %v867
        %887 = vmatprep.subr.bf16.mxu0 0
        %888 = vmatpush1.bf16.msra.mxu0 %v866
        %889 = vmatprep.subr.bf16.mxu0 0
        %890 = vmatpush1.bf16.msra.mxu0 %v865
        %891 = vmatprep.subr.bf16.mxu0 0
        %892 = vmatpush1.bf16.msra.mxu0 %v864
        %893 = vmatprep.subr.bf16.mxu0 0
        %894 = vmatpush1.bf16.msra.mxu0 %v863
        %895 = vmatprep.subr.bf16.mxu0 0
        %896 = vmatpush2.bf16.msra.mxu0 0
        %897 = vmatprep.subr.bf16.mxu0 0
        %898 = vmatpush2.bf16.msra.mxu0 0
        %899 = vmatprep.subr.bf16.mxu0 0
        %900 = vmatpush2.bf16.msra.mxu0 0
        %901 = vmatprep.subr.bf16.mxu0 0
        %902 = vmatpush2.bf16.msra.mxu0 0
        %903 = vmatprep.subr.bf16.mxu0 0
        %904 = vmatpush2.bf16.msra.mxu0 0
        %905 = vmatprep.subr.bf16.mxu0 0
        %906 = vmatpush2.bf16.msra.mxu0 0
        %907 = vmatprep.subr.bf16.mxu0 0
        %908 = vmatpush2.bf16.msra.mxu0 0
        %909 = vmatprep.subr.bf16.mxu0 0
        %910 = vmatpush2.bf16.msra.mxu0 0
        %911 = vmatprep.mubr.bf16.mxu0 0
        %912 = vmatmul.mubr.bf16.gmra.mxu0 %v803
        %v913 = vpop.f32.mrf.mxu0
        %v914 = vadd.f32 %v830, %v913
        %v915 = vpop.f32.mrf.mxu0
        %v916 = vpop.f32.mrf.mxu0
        %v917 = vadd.f32 %v830, %v916
        %v918 = vpop.f32.mrf.mxu0
        %919 = vmatprep.mubr.bf16.mxu0 0
        %920 = vmatmul.mubr.bf16.gmra.mxu0 %v804
        %v921 = vpop.f32.mrf.mxu0
        %v922 = vadd.f32 %v830, %v921
        %v923 = vpop.f32.mrf.mxu0
        %v924 = vpop.f32.mrf.mxu0
        %v925 = vadd.f32 %v830, %v924
        %v926 = vpop.f32.mrf.mxu0
        %927 = vmatprep.mubr.bf16.mxu0 0
        %928 = vmatmul.mubr.bf16.gmra.mxu0 %v805
        %v929 = vpop.f32.mrf.mxu0
        %v930 = vadd.f32 %v830, %v929
        %v931 = vpop.f32.mrf.mxu0
        %v932 = vpop.f32.mrf.mxu0
        %v933 = vadd.f32 %v830, %v932
        %v934 = vpop.f32.mrf.mxu0
        %935 = vmatprep.mubr.bf16.mxu0 0
        %936 = vmatmul.mubr.bf16.gmra.mxu0 %v806
        %v937 = vpop.f32.mrf.mxu0
        %v938 = vadd.f32 %v830, %v937
        %v939 = vpop.f32.mrf.mxu0
        %v940 = vpop.f32.mrf.mxu0
        %v941 = vadd.f32 %v830, %v940
        %v942 = vpop.f32.mrf.mxu0
        %943 = vmatprep.mubr.bf16.mxu0 0
        %944 = vmatmul.mubr.bf16.gmra.mxu0 %v807
        %v945 = vpop.f32.mrf.mxu0
        %v946 = vadd.f32 %v830, %v945
        %v947 = vpop.f32.mrf.mxu0
        %v948 = vpop.f32.mrf.mxu0
        %v949 = vadd.f32 %v830, %v948
        %v950 = vpop.f32.mrf.mxu0
        %951 = vmatprep.mubr.bf16.mxu0 0
        %952 = vmatmul.mubr.bf16.gmra.mxu0 %v808
        %v953 = vpop.f32.mrf.mxu0
        %v954 = vadd.f32 %v830, %v953
        %v955 = vpop.f32.mrf.mxu0
        %v956 = vpop.f32.mrf.mxu0
        %v957 = vadd.f32 %v830, %v956
        %v958 = vpop.f32.mrf.mxu0
        %959 = vmatprep.mubr.bf16.mxu0 0
        %960 = vmatmul.mubr.bf16.gmra.mxu0 %v809
        %v961 = vpop.f32.mrf.mxu0
        %v962 = vadd.f32 %v830, %v961
        %v963 = vpop.f32.mrf.mxu0
        %v964 = vpop.f32.mrf.mxu0
        %v965 = vadd.f32 %v830, %v964
        %v966 = vpop.f32.mrf.mxu0
        %967 = vmatprep.mubr.bf16.mxu0 0
        %968 = vmatmul.mubr.bf16.gmra.mxu0 %v810
        %v969 = vpop.f32.mrf.mxu0
        %v970 = vadd.f32 %v830, %v969
        %v971 = vpop.f32.mrf.mxu0
        %v972 = vpop.f32.mrf.mxu0
        %v973 = vadd.f32 %v830, %v972
        %v974 = vpop.f32.mrf.mxu0
        %975 = vdwg.mxu0
        %v976 = vlaneseq
        %v977 = vshrl.u32 %v976, 7
        %v978 = vadd.s32 %v977, 8
        %v979 = vadd.s32 %v977, 16
        %v980 = vadd.s32 %v977, 24
        %v981 = vadd.s32 %v977, 32
        %v982 = vadd.s32 %v977, 40
        %v983 = vadd.s32 %v977, 48
        %v984 = vadd.s32 %v977, 56
        %v985 = vadd.s32 %v977, 64
        %v986 = vadd.s32 %v977, 72
        %v987 = vadd.s32 %v977, 80
        %v988 = vadd.s32 %v977, 88
        %v989 = vadd.s32 %v977, 96
        %v990 = vadd.s32 %v977, 104
        %v991 = vadd.s32 %v977, 112
        %v992 = vadd.s32 %v977, 120
        %vm993 = vcmp.lt.s32.totalorder %v977, 16
        %vm994 = vcmp.lt.s32.totalorder %v978, 16
        %vm995 = vcmp.lt.s32.totalorder %v979, 16
        %vm996 = vcmp.lt.s32.totalorder %v980, 16
        %vm997 = vcmp.lt.s32.totalorder %v981, 16
        %vm998 = vcmp.lt.s32.totalorder %v982, 16
        %vm999 = vcmp.lt.s32.totalorder %v983, 16
        %vm1000 = vcmp.lt.s32.totalorder %v984, 16
        %vm1001 = vcmp.lt.s32.totalorder %v985, 16
        %vm1002 = vcmp.lt.s32.totalorder %v986, 16
        %vm1003 = vcmp.lt.s32.totalorder %v987, 16
        %vm1004 = vcmp.lt.s32.totalorder %v988, 16
        %vm1005 = vcmp.lt.s32.totalorder %v989, 16
        %vm1006 = vcmp.lt.s32.totalorder %v990, 16
        %vm1007 = vcmp.lt.s32.totalorder %v991, 16
        %vm1008 = vcmp.lt.s32.totalorder %v992, 16
        %v1009 = vsel %vm993, 1, 0
        %v1010 = vsel %vm994, 1, 0
        %v1011 = vsel %vm995, 1, 0
        %v1012 = vsel %vm996, 1, 0
        %v1013 = vsel %vm997, 1, 0
        %v1014 = vsel %vm998, 1, 0
        %v1015 = vsel %vm999, 1, 0
        %v1016 = vsel %vm1000, 1, 0
        %v1017 = vsel %vm1001, 1, 0
        %v1018 = vsel %vm1002, 1, 0
        %v1019 = vsel %vm1003, 1, 0
        %v1020 = vsel %vm1004, 1, 0
        %v1021 = vsel %vm1005, 1, 0
        %v1022 = vsel %vm1006, 1, 0
        %v1023 = vsel %vm1007, 1, 0
        %v1024 = vsel %vm1008, 1, 0
        %v1025 = vcvt.s32.f32 %v1009
        %v1026 = vcvt.s32.f32 %v1010
        %v1027 = vcvt.s32.f32 %v1011
        %v1028 = vcvt.s32.f32 %v1012
        %v1029 = vcvt.s32.f32 %v1013
        %v1030 = vcvt.s32.f32 %v1014
        %v1031 = vcvt.s32.f32 %v1015
        %v1032 = vcvt.s32.f32 %v1016
        %v1033 = vcvt.s32.f32 %v1017
        %v1034 = vcvt.s32.f32 %v1018
        %v1035 = vcvt.s32.f32 %v1019
        %v1036 = vcvt.s32.f32 %v1020
        %v1037 = vcvt.s32.f32 %v1021
        %v1038 = vcvt.s32.f32 %v1022
        %v1039 = vcvt.s32.f32 %v1023
        %v1040 = vcvt.s32.f32 %v1024
        %v1041 = vmul.f32 %v914, %v1025
        %v1042 = vmul.f32 %v917, %v1026
        %v1043 = vmul.f32 %v922, %v1027
        %v1044 = vmul.f32 %v925, %v1028
        %v1045 = vmul.f32 %v930, %v1029
        %v1046 = vmul.f32 %v933, %v1030
        %v1047 = vmul.f32 %v938, %v1031
        %v1048 = vmul.f32 %v941, %v1032
        %v1049 = vmul.f32 %v946, %v1033
        %v1050 = vmul.f32 %v949, %v1034
        %v1051 = vmul.f32 %v954, %v1035
        %v1052 = vmul.f32 %v957, %v1036
        %v1053 = vmul.f32 %v962, %v1037
        %v1054 = vmul.f32 %v965, %v1038
        %v1055 = vmul.f32 %v970, %v1039
        %v1056 = vmul.f32 %v973, %v1040
        %v1057 = vadd.f32 %v1041, %v1042
        %v1058 = vadd.f32 %v1057, %v1043
        %v1059 = vadd.f32 %v1058, %v1044
        %v1060 = vadd.f32 %v1059, %v1045
        %v1061 = vadd.f32 %v1060, %v1046
        %v1062 = vadd.f32 %v1061, %v1047
        %v1063 = vadd.f32 %v1062, %v1048
        %v1064 = vadd.f32 %v1063, %v1049
        %v1065 = vadd.f32 %v1064, %v1050
        %v1066 = vadd.f32 %v1065, %v1051
        %v1067 = vadd.f32 %v1066, %v1052
        %v1068 = vadd.f32 %v1067, %v1053
        %v1069 = vadd.f32 %v1068, %v1054
        %v1070 = vadd.f32 %v1069, %v1055
        %v1071 = vadd.f32 %v1070, %v1056
        %v1072 = vrot.slane %v1071, 4
        %v1073 = vadd.f32 %v1071, %v1072
        %v1074 = vrot.slane %v1073, 2
        %v1075 = vadd.f32 %v1073, %v1074
        %v1076 = vrot.slane %v1075, 1
        %v1077 = vadd.f32 %v1075, %v1076
        %v1078 = vmul.f32 %v1077, 0.0625
        %v1079 = vsub.f32 %v914, %v1078
        %v1080 = vsub.f32 %v917, %v1078
        %v1081 = vsub.f32 %v922, %v1078
        %v1082 = vsub.f32 %v925, %v1078
        %v1083 = vsub.f32 %v930, %v1078
        %v1084 = vsub.f32 %v933, %v1078
        %v1085 = vsub.f32 %v938, %v1078
        %v1086 = vsub.f32 %v941, %v1078
        %v1087 = vsub.f32 %v946, %v1078
        %v1088 = vsub.f32 %v949, %v1078
        %v1089 = vsub.f32 %v954, %v1078
        %v1090 = vsub.f32 %v957, %v1078
        %v1091 = vsub.f32 %v962, %v1078
        %v1092 = vsub.f32 %v965, %v1078
        %v1093 = vsub.f32 %v970, %v1078
        %v1094 = vsub.f32 %v973, %v1078
        %v1095 = vmul.f32 %v1079, %v1079
        %v1096 = vmul.f32 %v1080, %v1080
        %v1097 = vmul.f32 %v1081, %v1081
        %v1098 = vmul.f32 %v1082, %v1082
        %v1099 = vmul.f32 %v1083, %v1083
        %v1100 = vmul.f32 %v1084, %v1084
        %v1101 = vmul.f32 %v1085, %v1085
        %v1102 = vmul.f32 %v1086, %v1086
        %v1103 = vmul.f32 %v1087, %v1087
        %v1104 = vmul.f32 %v1088, %v1088
        %v1105 = vmul.f32 %v1089, %v1089
        %v1106 = vmul.f32 %v1090, %v1090
        %v1107 = vmul.f32 %v1091, %v1091
        %v1108 = vmul.f32 %v1092, %v1092
        %v1109 = vmul.f32 %v1093, %v1093
        %v1110 = vmul.f32 %v1094, %v1094
        %v1111 = vmul.f32 %v1095, %v1025
        %v1112 = vmul.f32 %v1096, %v1026
        %v1113 = vmul.f32 %v1097, %v1027
        %v1114 = vmul.f32 %v1098, %v1028
        %v1115 = vmul.f32 %v1099, %v1029
        %v1116 = vmul.f32 %v1100, %v1030
        %v1117 = vmul.f32 %v1101, %v1031
        %v1118 = vmul.f32 %v1102, %v1032
        %v1119 = vmul.f32 %v1103, %v1033
        %v1120 = vmul.f32 %v1104, %v1034
        %v1121 = vmul.f32 %v1105, %v1035
        %v1122 = vmul.f32 %v1106, %v1036
        %v1123 = vmul.f32 %v1107, %v1037
        %v1124 = vmul.f32 %v1108, %v1038
        %v1125 = vmul.f32 %v1109, %v1039
        %v1126 = vmul.f32 %v1110, %v1040
        %v1127 = vadd.f32 %v1111, %v1112
        %v1128 = vadd.f32 %v1127, %v1113
        %v1129 = vadd.f32 %v1128, %v1114
        %v1130 = vadd.f32 %v1129, %v1115
        %v1131 = vadd.f32 %v1130, %v1116
        %v1132 = vadd.f32 %v1131, %v1117
        %v1133 = vadd.f32 %v1132, %v1118
        %v1134 = vadd.f32 %v1133, %v1119
        %v1135 = vadd.f32 %v1134, %v1120
        %v1136 = vadd.f32 %v1135, %v1121
        %v1137 = vadd.f32 %v1136, %v1122
        %v1138 = vadd.f32 %v1137, %v1123
        %v1139 = vadd.f32 %v1138, %v1124
        %v1140 = vadd.f32 %v1139, %v1125
        %v1141 = vadd.f32 %v1140, %v1126
        %v1142 = vrot.slane %v1141, 4
        %v1143 = vadd.f32 %v1141, %v1142
        %v1144 = vrot.slane %v1143, 2
        %v1145 = vadd.f32 %v1143, %v1144
        %v1146 = vrot.slane %v1145, 1
        %v1147 = vadd.f32 %v1145, %v1146
        %v1148 = vmul.f32 %v1147, 0.0625
        %v1149 = vlaneseq
        %v1150 = vshrl.u32 %v1149, 7
        %v1151 = vsub.s32 2, %v1150
        %v1152 = vrot.slane %v613, %v1151
        %v1153 = vmul.f32 %v1152, %v1079
        %v1154 = vmul.f32 %v1152, %v1080
        %v1155 = vmul.f32 %v1152, %v1081
        %v1156 = vmul.f32 %v1152, %v1082
        %v1157 = vmul.f32 %v1152, %v1083
        %v1158 = vmul.f32 %v1152, %v1084
        %v1159 = vmul.f32 %v1152, %v1085
        %v1160 = vmul.f32 %v1152, %v1086
        %v1161 = vmul.f32 %v1152, %v1087
        %v1162 = vmul.f32 %v1152, %v1088
        %v1163 = vmul.f32 %v1152, %v1089
        %v1164 = vmul.f32 %v1152, %v1090
        %v1165 = vmul.f32 %v1152, %v1091
        %v1166 = vmul.f32 %v1152, %v1092
        %v1167 = vmul.f32 %v1152, %v1093
        %v1168 = vmul.f32 %v1152, %v1094
        %v1169 = vadd.f32 %v1148, 1e-05
        %v1170 = vrsqrt.pop %v1169
        %v1171 = vmul.f32 %v1153, %v1170
        %v1172 = vmul.f32 %v1154, %v1170
        %v1173 = vmul.f32 %v1155, %v1170
        %v1174 = vmul.f32 %v1156, %v1170
        %v1175 = vmul.f32 %v1157, %v1170
        %v1176 = vmul.f32 %v1158, %v1170
        %v1177 = vmul.f32 %v1159, %v1170
        %v1178 = vmul.f32 %v1160, %v1170
        %v1179 = vmul.f32 %v1161, %v1170
        %v1180 = vmul.f32 %v1162, %v1170
        %v1181 = vmul.f32 %v1163, %v1170
        %v1182 = vmul.f32 %v1164, %v1170
        %v1183 = vmul.f32 %v1165, %v1170
        %v1184 = vmul.f32 %v1166, %v1170
        %v1185 = vmul.f32 %v1167, %v1170
        %v1186 = vmul.f32 %v1168, %v1170
        %v1187 = vlaneseq
        %v1188 = vshrl.u32 %v1187, 7
        %v1189 = vsub.s32 3, %v1188
        %v1190 = vrot.slane %v613, %v1189
        %v1191 = vadd.f32 %v1171, %v1190
        %v1192 = vadd.f32 %v1172, %v1190
        %v1193 = vadd.f32 %v1173, %v1190
        %v1194 = vadd.f32 %v1174, %v1190
        %v1195 = vadd.f32 %v1175, %v1190
        %v1196 = vadd.f32 %v1176, %v1190
        %v1197 = vadd.f32 %v1177, %v1190
        %v1198 = vadd.f32 %v1178, %v1190
        %v1199 = vadd.f32 %v1179, %v1190
        %v1200 = vadd.f32 %v1180, %v1190
        %v1201 = vadd.f32 %v1181, %v1190
        %v1202 = vadd.f32 %v1182, %v1190
        %v1203 = vadd.f32 %v1183, %v1190
        %v1204 = vadd.f32 %v1184, %v1190
        %v1205 = vadd.f32 %v1185, %v1190
        %v1206 = vadd.f32 %v1186, %v1190
        %p1207 = scmp.lt.s32.totalorder %s20, 4
        // Predicated region
        $region73: #{tpu_custom_call.1} parent=43 // pred_check
          %p1208 = pneg %p1207
        $region74: #{tpu_custom_call.1} parent=43 // pred_check_branch
          %1210 = sbr.rel (%p1208) target = $region76
        $region75: #{tpu_custom_call.1} parent=43 // pred_region
          %v1211 = vmax.f32 %v1191, 0.0
          %v1212 = vmax.f32 %v1192, 0.0
          %v1213 = vmax.f32 %v1193, 0.0
          %v1214 = vmax.f32 %v1194, 0.0
          %v1215 = vmax.f32 %v1195, 0.0
          %v1216 = vmax.f32 %v1196, 0.0
          %v1217 = vmax.f32 %v1197, 0.0
          %v1218 = vmax.f32 %v1198, 0.0
          %v1219 = vmax.f32 %v1199, 0.0
          %v1220 = vmax.f32 %v1200, 0.0
          %v1221 = vmax.f32 %v1201, 0.0
          %v1222 = vmax.f32 %v1202, 0.0
          %v1223 = vmax.f32 %v1203, 0.0
          %v1224 = vmax.f32 %v1204, 0.0
          %v1225 = vmax.f32 %v1205, 0.0
          %v1226 = vmax.f32 %v1206, 0.0
          %1227 = vst [vmem:[#allocation11] sm:$0xff] %v1211
          %1228 = vst [vmem:[#allocation11 + $0x8] sm:$0xff] %v1212
          %1229 = vst [vmem:[#allocation11 + $0x10] sm:$0xff] %v1213
          %1230 = vst [vmem:[#allocation11 + $0x18] sm:$0xff] %v1214
          %1231 = vst [vmem:[#allocation11 + $0x20] sm:$0xff] %v1215
          %1232 = vst [vmem:[#allocation11 + $0x28] sm:$0xff] %v1216
          %1233 = vst [vmem:[#allocation11 + $0x30] sm:$0xff] %v1217
          %1234 = vst [vmem:[#allocation11 + $0x38] sm:$0xff] %v1218
          %1235 = vst [vmem:[#allocation11 + $0x40] sm:$0xff] %v1219
          %1236 = vst [vmem:[#allocation11 + $0x48] sm:$0xff] %v1220
          %1237 = vst [vmem:[#allocation11 + $0x50] sm:$0xff] %v1221
          %1238 = vst [vmem:[#allocation11 + $0x58] sm:$0xff] %v1222
          %1239 = vst [vmem:[#allocation11 + $0x60] sm:$0xff] %v1223
          %1240 = vst [vmem:[#allocation11 + $0x68] sm:$0xff] %v1224
          %1241 = vst [vmem:[#allocation11 + $0x70] sm:$0xff] %v1225
          %1242 = vst [vmem:[#allocation11 + $0x78] sm:$0xff] %v1226
        $region76: #{tpu_custom_call.1} parent=43 // pred_fallthru
          _
        %p1243 = scmp.eq.s32.totalorder %s20, 4
        // Predicated region
        $region77: #{tpu_custom_call.1} parent=43 // pred_check
          %p1244 = pneg %p1243
        $region78: #{tpu_custom_call.1} parent=43 // pred_check_branch
          %1246 = sbr.rel (%p1244) target = $region80
        $region79: #{tpu_custom_call.1} parent=43 // pred_region
          %1247 = vst [vmem:[#allocation11] sm:$0xff] %v1191
          %1248 = vst [vmem:[#allocation11 + $0x8] sm:$0xff] %v1192
          %1249 = vst [vmem:[#allocation11 + $0x10] sm:$0xff] %v1193
          %1250 = vst [vmem:[#allocation11 + $0x18] sm:$0xff] %v1194
          %1251 = vst [vmem:[#allocation11 + $0x20] sm:$0xff] %v1195
          %1252 = vst [vmem:[#allocation11 + $0x28] sm:$0xff] %v1196
          %1253 = vst [vmem:[#allocation11 + $0x30] sm:$0xff] %v1197
          %1254 = vst [vmem:[#allocation11 + $0x38] sm:$0xff] %v1198
          %1255 = vst [vmem:[#allocation11 + $0x40] sm:$0xff] %v1199
          %1256 = vst [vmem:[#allocation11 + $0x48] sm:$0xff] %v1200
          %1257 = vst [vmem:[#allocation11 + $0x50] sm:$0xff] %v1201
          %1258 = vst [vmem:[#allocation11 + $0x58] sm:$0xff] %v1202
          %1259 = vst [vmem:[#allocation11 + $0x60] sm:$0xff] %v1203
          %1260 = vst [vmem:[#allocation11 + $0x68] sm:$0xff] %v1204
          %1261 = vst [vmem:[#allocation11 + $0x70] sm:$0xff] %v1205
          %1262 = vst [vmem:[#allocation11 + $0x78] sm:$0xff] %v1206
        $region80: #{tpu_custom_call.1} parent=43 // pred_fallthru
          _
        // Predicated region
        $region81: #{tpu_custom_call.1} parent=43 // pred_check
          %p1263 = pneg %p174
        $region82: #{tpu_custom_call.1} parent=43 // pred_check_branch
          %1265 = sbr.rel (%p1263) target = $region84
        $region83: #{tpu_custom_call.1} parent=43 // pred_region
          %s1267 = ssub.s32 2048, 2048
          %1268 = vsyncadd [#allocation4], %s1267
          %s1269 = sshll.u32 [#allocation11], 4
          %s1270 = int_to_ptr.vmem [resolvable:$true] %s1269
          %1275 = dma.vmem_to_hbm [thread:$0]  %s1270, 2048, %s6, [#allocation4], 128, 128, 8
        $region84: #{tpu_custom_call.1} parent=43 // pred_fallthru
          _
        // Predicated region
        $region85: #{tpu_custom_call.1} parent=43 // pred_check
          %p1276 = pneg %p174
        $region86: #{tpu_custom_call.1} parent=43 // pred_check_branch
          %1278 = sbr.rel (%p1276) target = $region88
        $region87: #{tpu_custom_call.1} parent=43 // pred_region
          %1279 = dma.done [#allocation4], 2048
        $region88: #{tpu_custom_call.1} parent=43 // pred_fallthru
          _
      $region44: #{tpu_custom_call.1} parent=5 // pred_fallthru
        _
      %p1280 = scmp.le.s32.totalorder 2, %s15
      // Predicated region
      $region89: #{tpu_custom_call.1} parent=5 // pred_check
        %p1281 = pneg %p1280
      $region90: #{tpu_custom_call.1} parent=5 // pred_check_branch
        %1283 = sbr.rel (%p1281) target = $region92
      $region91: #{tpu_custom_call.1} parent=5 // pred_region
        %s1284 = ssub.s32 %s15, 2
      $region92: #{tpu_custom_call.1} parent=5 // pred_fallthru
        _
    $region6: #{tpu_custom_call.1} parent=1 // loop_footer
      %s19 = sadd.s32 1, %s15
    $region7: #{tpu_custom_call.1} parent=1 // loop_footer_branch
      %14 = sbr.rel target = $region3
    $region8: #{tpu_custom_call.1} parent=1 // loop_exit
      _
    %1285 = vsyncpa [#allocation3], 1
    %s1286 = scalar_lea.sflag [#allocation3], 1
    %1287 = vsyncpa %s1286, 1
    %1288 = vsyncpa [#allocation6], 1
    %1289 = vsyncpa [#allocation4], 1
    %s1290 = scalar_lea.sflag [#allocation4], 1
    %1291 = vsyncpa %s1290, 1

// kernel: tpu_custom_call.1
$region0: #{tpu_custom_call.1}
  #allocation0 [shape = 'u32[]', space=smem, size = 0x4, offset = 0x4, fixed_abs, tag = 'smem constant byte address 0x4 - core index']
  #allocation1 [shape = 'u32[144,128]{1,0:T(1,128)}', space=vmem, size = 0x12000, scoped, tag = 'internal scratch']
  %s0 = inlined_call_operand.hbm [shape: bf16[128,128], index: 0, kind: input, shape index: {}]
  %s1 = inlined_call_operand.hbm [shape: f32[128,128], index: 1, kind: input, shape index: {}]
  %s2 = inlined_call_operand.hbm [shape: f32[5,128,128], index: 2, kind: input, shape index: {}]
  %s3 = inlined_call_operand.hbm [shape: bf16[5,128,128], index: 3, kind: input, shape index: {}]
  %s4 = inlined_call_operand.hbm [shape: bf16[5,128,128], index: 4, kind: input, shape index: {}]
  %s5 = inlined_call_operand.hbm [shape: f32[5,8,128], index: 5, kind: input, shape index: {}]
  %s6 = inlined_call_operand.hbm [shape: f32[128,128], index: 6, kind: output, shape index: {}]
  %s7 = sld [smem:[#allocation0]]
  $region93: #{tpu_custom_call.1} parent=0
    _
  %s9 = ssub.s32 1, %s7
  %s10 = scalar_select 0, %s9, %s7
  $region1: #{tpu_custom_call.1} parent=0
    #allocation2 [shape = 'u8[32768]{0}', space=vmem, size = 0x8000, scoped, tag = 'input window, operand 0, single buffered']
    #allocation3 [shape = 's32[2]{0}', space=sflag, size = 0x8, scoped, tag = 'scoped memory for tpu_custom_call.1']
    #allocation4 [shape = 's32[2]{0}', space=sflag, size = 0x8, scoped, tag = 'scoped memory for tpu_custom_call.1']
    #allocation5 [shape = 'u8[65536]{0}', space=vmem, size = 0x10000, scoped, tag = 'input window, operand 1, single buffered']
    #allocation6 [shape = 's32[1]{0}', space=sflag, size = 0x4, scoped, tag = 'scoped memory for tpu_custom_call.1']
    #allocation7 [shape = 'u8[131072]{0}', space=vmem, size = 0x20000, scoped, tag = 'input window, operand 2']
    #allocation8 [shape = 'u8[65536]{0}', space=vmem, size = 0x10000, scoped, tag = 'input window, operand 3']
    #allocation9 [shape = 'u8[65536]{0}', space=vmem, size = 0x10000, scoped, tag = 'input window, operand 4']
    #allocation10 [shape = 'u8[20480]{0}', space=vmem, size = 0x5000, scoped, tag = 'input window, operand 5, single buffered']
    #allocation11 [shape = 'u8[65536]{0}', space=vmem, size = 0x10000, scoped, tag = 'output window, operand 0, single buffered']
    %11 = vsyncpa [#allocation3], 0
    %12 = vsyncpa [#allocation6], 0
    %13 = vsyncpa [#allocation4], 0
    loop: start=0, step=1, limit=7
    $region2: #{tpu_custom_call.1} parent=1 // loop_pre_header
      _
    $region3: #{tpu_custom_call.1} parent=1 // loop_header
      %s15 = sphi 0, %s19
      %p16 = scmp.ge.s32.totalorder %s15, 7
      %s23 = sphi 0, %s23
      %s25 = sphi 0, %s23
      %s26 = sphi 0, %s25
      %s40 = sphi 0, %s26
      %s44 = sphi 0, %s44
      %s46 = sphi 0, %s44
      %s47 = sphi 0, %s46
      %s61 = sphi 0, %s47
      %s67 = sphi 0, %s69
      %s70 = sphi 0, %s67
      %s71 = sphi 0, %s70
      %s87 = sphi 0, %s71
      %s93 = sphi 0, %s95
      %s96 = sphi 0, %s93
      %s97 = sphi 0, %s96
      %s113 = sphi 0, %s97
      %s119 = sphi 0, %s121
      %s122 = sphi 0, %s119
      %s123 = sphi 0, %s122
      %s139 = sphi 0, %s123
      %s143 = sphi 0, %s143
      %s145 = sphi 0, %s143
      %s146 = sphi 0, %s145
      %s160 = sphi 0, %s146
      %s164 = sphi 0, %s164
      %s166 = sphi 0, %s164
      %s167 = sphi 0, %s166
      %s181 = sphi 0, %s167
    $region4: #{tpu_custom_call.1} parent=1 // loop_header_branch
      %18 = sbr.rel (%p16) target = $region8
    $region5: #{tpu_custom_call.1} parent=1 // loop_body
      %s20 = ssub.s32 %s15, 1
      %s21 = ssub.s32 %s15, 2
      %s22 = sadd.s32 %s15, 1
      %s24 = sadd.s32 %s23, 1
      %p27 = scmp.eq.s32.totalorder %s15, 4
      %p28 = scmp.ne.s32.totalorder %s23, %s25
      %p29 = scmp.eq.s32.totalorder %s15, 0
      %p30 = por %p28, %p29
      %p31 = scmp.ne.s32.totalorder %s23, %s25
      %p32 = scmp.eq.s32.totalorder %s20, 4
      %p33 = por %p31, %p32
      %p34 = scmp.ne.s32.totalorder %s25, %s26
      %p35 = scmp.eq.s32.totalorder %s20, 0
      %p36 = por %p34, %p35
      %p37 = scmp.ne.s32.totalorder %s25, %s26
      %p38 = scmp.eq.s32.totalorder %s21, 4
      %p39 = por %p37, %p38
      %p41 = scmp.ne.s32.totalorder %s26, %s40
      %p42 = scmp.eq.s32.totalorder %s21, 0
      %p43 = por %p41, %p42
      %s45 = sadd.s32 %s44, 1
      %p48 = scmp.eq.s32.totalorder %s15, 4
      %p49 = scmp.ne.s32.totalorder %s44, %s46
      %p50 = scmp.eq.s32.totalorder %s15, 0
      %p51 = por %p49, %p50
      %p52 = scmp.ne.s32.totalorder %s44, %s46
      %p53 = scmp.eq.s32.totalorder %s20, 4
      %p54 = por %p52, %p53
      %p55 = scmp.ne.s32.totalorder %s46, %s47
      %p56 = scmp.eq.s32.totalorder %s20, 0
      %p57 = por %p55, %p56
      %p58 = scmp.ne.s32.totalorder %s46, %s47
      %p59 = scmp.eq.s32.totalorder %s21, 4
      %p60 = por %p58, %p59
      %p62 = scmp.ne.s32.totalorder %s47, %s61
      %p63 = scmp.eq.s32.totalorder %s21, 0
      %p64 = por %p62, %p63
      %s65 = ssub.s32 %s15, %s22
      %p66 = scmp.eq.s32.totalorder %s65, 0
      %s68 = sadd.s32 %s67, 1
      %s69 = scalar_select %p66, %s67, %s68
      %p72 = pneg %p66
      %p73 = scmp.eq.s32.totalorder %s15, 4
      %p74 = por %p72, %p73
      %p75 = scmp.ne.s32.totalorder %s67, %s70
      %p76 = scmp.eq.s32.totalorder %s15, 0
      %p77 = por %p75, %p76
      %p78 = scmp.ne.s32.totalorder %s67, %s70
      %p79 = scmp.eq.s32.totalorder %s20, 4
      %p80 = por %p78, %p79
      %p81 = scmp.ne.s32.totalorder %s70, %s71
      %p82 = scmp.eq.s32.totalorder %s20, 0
      %p83 = por %p81, %p82
      %p84 = scmp.ne.s32.totalorder %s70, %s71
      %p85 = scmp.eq.s32.totalorder %s21, 4
      %p86 = por %p84, %p85
      %p88 = scmp.ne.s32.totalorder %s71, %s87
      %p89 = scmp.eq.s32.totalorder %s21, 0
      %p90 = por %p88, %p89
      %s91 = ssub.s32 %s15, %s22
      %p92 = scmp.eq.s32.totalorder %s91, 0
      %s94 = sadd.s32 %s93, 1
      %s95 = scalar_select %p92, %s93, %s94
      %p98 = pneg %p92
      %p99 = scmp.eq.s32.totalorder %s15, 4
      %p100 = por %p98, %p99
      %p101 = scmp.ne.s32.totalorder %s93, %s96
      %p102 = scmp.eq.s32.totalorder %s15, 0
      %p103 = por %p101, %p102
      %p104 = scmp.ne.s32.totalorder %s93, %s96
      %p105 = scmp.eq.s32.totalorder %s20, 4
      %p106 = por %p104, %p105
      %p107 = scmp.ne.s32.totalorder %s96, %s97
      %p108 = scmp.eq.s32.totalorder %s20, 0
      %p109 = por %p107, %p108
      %p110 = scmp.ne.s32.totalorder %s96, %s97
      %p111 = scmp.eq.s32.totalorder %s21, 4
      %p112 = por %p110, %p111
      %p114 = scmp.ne.s32.totalorder %s97, %s113
      %p115 = scmp.eq.s32.totalorder %s21, 0
      %p116 = por %p114, %p115
      %s117 = ssub.s32 %s15, %s22
      %p118 = scmp.eq.s32.totalorder %s117, 0
      %s120 = sadd.s32 %s119, 1
      %s121 = scalar_select %p118, %s119, %s120
      %p124 = pneg %p118
      %p125 = scmp.eq.s32.totalorder %s15, 4
      %p126 = por %p124, %p125
      %p127 = scmp.ne.s32.totalorder %s119, %s122
      %p128 = scmp.eq.s32.totalorder %s15, 0
      %p129 = por %p127, %p128
      %p130 = scmp.ne.s32.totalorder %s119, %s122
      %p131 = scmp.eq.s32.totalorder %s20, 4
      %p132 = por %p130, %p131
      %p133 = scmp.ne.s32.totalorder %s122, %s123
      %p134 = scmp.eq.s32.totalorder %s20, 0
      %p135 = por %p133, %p134
      %p136 = scmp.ne.s32.totalorder %s122, %s123
      %p137 = scmp.eq.s32.totalorder %s21, 4
      %p138 = por %p136, %p137
      %p140 = scmp.ne.s32.totalorder %s123, %s139
      %p141 = scmp.eq.s32.totalorder %s21, 0
      %p142 = por %p140, %p141
      %s144 = sadd.s32 %s143, 1
      %p147 = scmp.eq.s32.totalorder %s15, 4
      %p148 = scmp.ne.s32.totalorder %s143, %s145
      %p149 = scmp.eq.s32.totalorder %s15, 0
      %p150 = por %p148, %p149
      %p151 = scmp.ne.s32.totalorder %s143, %s145
      %p152 = scmp.eq.s32.totalorder %s20, 4
      %p153 = por %p151, %p152
      %p154 = scmp.ne.s32.totalorder %s145, %s146
      %p155 = scmp.eq.s32.totalorder %s20, 0
      %p156 = por %p154, %p155
      %p157 = scmp.ne.s32.totalorder %s145, %s146
      %p158 = scmp.eq.s32.totalorder %s21, 4
      %p159 = por %p157, %p158
      %p161 = scmp.ne.s32.totalorder %s146, %s160
      %p162 = scmp.eq.s32.totalorder %s21, 0
      %p163 = por %p161, %p162
      %s165 = sadd.s32 %s164, 1
      %p168 = scmp.eq.s32.totalorder %s15, 4
      %p169 = scmp.ne.s32.totalorder %s164, %s166
      %p170 = scmp.eq.s32.totalorder %s15, 0
      %p171 = por %p169, %p170
      %p172 = scmp.ne.s32.totalorder %s164, %s166
      %p173 = scmp.eq.s32.totalorder %s20, 4
      %p174 = por %p172, %p173
      %p175 = scmp.ne.s32.totalorder %s166, %s167
      %p176 = scmp.eq.s32.totalorder %s20, 0
      %p177 = por %p175, %p176
      %p178 = scmp.ne.s32.totalorder %s166, %s167
      %p179 = scmp.eq.s32.totalorder %s21, 4
      %p180 = por %p178, %p179
      %p182 = scmp.ne.s32.totalorder %s167, %s181
      %p183 = scmp.eq.s32.totalorder %s21, 0
      %p184 = por %p182, %p183
      %p185 = scmp.le.s32.totalorder 1, %s15
      %p186 = scmp.lt.s32.totalorder %s15, 6
      %p187 = pnand %p185, %p186
      %p188 = pneg %p187
      // Predicated region
      $region9: #{tpu_custom_call.1} parent=5 // pred_check
        _
      $region10: #{tpu_custom_call.1} parent=5 // pred_check_branch
        %190 = sbr.rel (%p187) target = $region12
      $region11: #{tpu_custom_call.1} parent=5 // pred_region
        %s191 = ssub.s32 %s15, 1
        // Predicated region
        $region13: #{tpu_custom_call.1} parent=11 // pred_check
          %p192 = pneg %p36
        $region14: #{tpu_custom_call.1} parent=11 // pred_check_branch
          %194 = sbr.rel (%p192) target = $region16
        $region15: #{tpu_custom_call.1} parent=11 // pred_region
          %s196 = ssub.s32 1024, 1024
          %197 = vsyncadd [#allocation3], %s196
          %s198 = sshll.u32 [#allocation2], 4
          %s199 = int_to_ptr.vmem [resolvable:$true] %s198
          %204 = dma.hbm_to_vmem [thread:$0]  %s0, 1024, %s199, [#allocation3], 64, 64, 4
        $region16: #{tpu_custom_call.1} parent=11 // pred_fallthru
          _
        // Predicated region
        $region17: #{tpu_custom_call.1} parent=11 // pred_check
          %p205 = pneg %p57
        $region18: #{tpu_custom_call.1} parent=11 // pred_check_branch
          %207 = sbr.rel (%p205) target = $region20
        $region19: #{tpu_custom_call.1} parent=11 // pred_region
          %s209 = ssub.s32 2048, 2048
          %210 = vsyncadd [#allocation6], %s209
          %s211 = sshll.u32 [#allocation5], 4
          %s212 = int_to_ptr.vmem [resolvable:$true] %s211
          %217 = dma.hbm_to_vmem [thread:$0]  %s1, 2048, %s212, [#allocation6], 128, 128, 8
        $region20: #{tpu_custom_call.1} parent=11 // pred_fallthru
          _
        // Predicated region
        $region21: #{tpu_custom_call.1} parent=11 // pred_check
          %p218 = pneg %p156
        $region22: #{tpu_custom_call.1} parent=11 // pred_check_branch
          %220 = sbr.rel (%p218) target = $region24
        $region23: #{tpu_custom_call.1} parent=11 // pred_region
          %s222 = ssub.s32 640, 640
          %223 = vsyncadd [#allocation6], %s222
          %s224 = sshll.u32 [#allocation10], 4
          %s225 = int_to_ptr.vmem [resolvable:$true] %s224
          %230 = dma.hbm_to_vmem [thread:$0]  %s5, 640, %s225, [#allocation6], 128, 128, 8
        $region24: #{tpu_custom_call.1} parent=11 // pred_fallthru
          _
      $region12: #{tpu_custom_call.1} parent=5 // pred_fallthru
        _
      %p231 = scmp.lt.s32.totalorder %s15, 5
      // Predicated region
      $region25: #{tpu_custom_call.1} parent=5 // pred_check
        %p232 = pneg %p231
      $region26: #{tpu_custom_call.1} parent=5 // pred_check_branch
        %234 = sbr.rel (%p232) target = $region28
      $region27: #{tpu_custom_call.1} parent=5 // pred_region
        // Predicated region
        $region29: #{tpu_custom_call.1} parent=27 // pred_check
          %p235 = pneg %p77
        $region30: #{tpu_custom_call.1} parent=27 // pred_check_branch
          %237 = sbr.rel (%p235) target = $region32
        $region31: #{tpu_custom_call.1} parent=27 // pred_region
          %s238 = sand.u32 %s15, 1
          %s239 = scalar_lea.sflag [#allocation3], %s238
          %s240 = sand.u32 %s67, 1
          %s241 = smul.addr %s240, 128
          %s242 = scalar_lea.vmem [#allocation7], %s241
          %s244 = ssub.s32 2048, 2048
          %245 = vsyncadd %s239, %s244
          %s246 = smul.addr %s15, 16
          %s247 = smul.addr %s246, 128
          %s248 = scalar_lea.hbm %s2, %s247
          %s249 = sshll.u32 %s242, 4
          %s250 = int_to_ptr.vmem [resolvable:$true] %s249
          %255 = dma.hbm_to_vmem [thread:$0]  %s248, 2048, %s250, %s239, 128, 128, 8
        $region32: #{tpu_custom_call.1} parent=27 // pred_fallthru
          _
        // Predicated region
        $region33: #{tpu_custom_call.1} parent=27 // pred_check
          %p256 = pneg %p103
        $region34: #{tpu_custom_call.1} parent=27 // pred_check_branch
          %258 = sbr.rel (%p256) target = $region36
        $region35: #{tpu_custom_call.1} parent=27 // pred_region
          %s259 = sand.u32 %s15, 1
          %s260 = scalar_lea.sflag [#allocation3], %s259
          %s261 = sand.u32 %s93, 1
          %s262 = smul.addr %s261, 64
          %s263 = scalar_lea.vmem [#allocation8], %s262
          %s265 = ssub.s32 1024, 1024
          %266 = vsyncadd %s260, %s265
          %s267 = smul.addr %s15, 16
          %s268 = smul.addr %s267, 64
          %s269 = scalar_lea.hbm %s3, %s268
          %s270 = sshll.u32 %s263, 4
          %s271 = int_to_ptr.vmem [resolvable:$true] %s270
          %276 = dma.hbm_to_vmem [thread:$0]  %s269, 1024, %s271, %s260, 64, 64, 4
        $region36: #{tpu_custom_call.1} parent=27 // pred_fallthru
          _
        // Predicated region
        $region37: #{tpu_custom_call.1} parent=27 // pred_check
          %p277 = pneg %p129
        $region38: #{tpu_custom_call.1} parent=27 // pred_check_branch
          %279 = sbr.rel (%p277) target = $region40
        $region39: #{tpu_custom_call.1} parent=27 // pred_region
          %s280 = sand.u32 %s15, 1
          %s281 = scalar_lea.sflag [#allocation3], %s280
          %s282 = sand.u32 %s119, 1
          %s283 = smul.addr %s282, 64
          %s284 = scalar_lea.vmem [#allocation9], %s283
          %s286 = ssub.s32 1024, 1024
          %287 = vsyncadd %s281, %s286
          %s288 = smul.addr %s15, 16
          %s289 = smul.addr %s288, 64
          %s290 = scalar_lea.hbm %s4, %s289
          %s291 = sshll.u32 %s284, 4
          %s292 = int_to_ptr.vmem [resolvable:$true] %s291
          %297 = dma.hbm_to_vmem [thread:$0]  %s290, 1024, %s292, %s281, 64, 64, 4
        $region40: #{tpu_custom_call.1} parent=27 // pred_fallthru
          _
      $region28: #{tpu_custom_call.1} parent=5 // pred_fallthru
        _
      %p298 = scmp.le.s32.totalorder 1, %s15
      %p299 = scmp.lt.s32.totalorder %s15, 6
      %p300 = pnand %p298, %p299
      %p301 = pneg %p300
      // Predicated region
      $region41: #{tpu_custom_call.1} parent=5 // pred_check
        _
      $region42: #{tpu_custom_call.1} parent=5 // pred_check_branch
        %303 = sbr.rel (%p300) target = $region44
      $region43: #{tpu_custom_call.1} parent=5 // pred_region
        %s304 = ssub.s32 %s15, 1
        // Predicated region
        $region45: #{tpu_custom_call.1} parent=43 // pred_check
          %p305 = pneg %p36
        $region46: #{tpu_custom_call.1} parent=43 // pred_check_branch
          %307 = sbr.rel (%p305) target = $region48
        $region47: #{tpu_custom_call.1} parent=43 // pred_region
          %308 = dma.done [#allocation3], 1024
        $region48: #{tpu_custom_call.1} parent=43 // pred_fallthru
          _
        // Predicated region
        $region49: #{tpu_custom_call.1} parent=43 // pred_check
          %p309 = pneg %p57
        $region50: #{tpu_custom_call.1} parent=43 // pred_check_branch
          %311 = sbr.rel (%p309) target = $region52
        $region51: #{tpu_custom_call.1} parent=43 // pred_region
          %312 = dma.done [#allocation6], 2048
        $region52: #{tpu_custom_call.1} parent=43 // pred_fallthru
          _
        %s313 = sand.u32 %s20, 1
        %s314 = scalar_lea.sflag [#allocation3], %s313
        %s315 = sand.u32 %s70, 1
        %s316 = smul.addr %s315, 128
        %s317 = scalar_lea.vmem [#allocation7], %s316
        // Predicated region
        $region53: #{tpu_custom_call.1} parent=43 // pred_check
          %p318 = pneg %p83
        $region54: #{tpu_custom_call.1} parent=43 // pred_check_branch
          %320 = sbr.rel (%p318) target = $region56
        $region55: #{tpu_custom_call.1} parent=43 // pred_region
          %321 = dma.done %s314, 2048
        $region56: #{tpu_custom_call.1} parent=43 // pred_fallthru
          _
        %s322 = sand.u32 %s20, 1
        %s323 = scalar_lea.sflag [#allocation3], %s322
        %s324 = sand.u32 %s96, 1
        %s325 = smul.addr %s324, 64
        %s326 = scalar_lea.vmem [#allocation8], %s325
        // Predicated region
        $region57: #{tpu_custom_call.1} parent=43 // pred_check
          %p327 = pneg %p109
        $region58: #{tpu_custom_call.1} parent=43 // pred_check_branch
          %329 = sbr.rel (%p327) target = $region60
        $region59: #{tpu_custom_call.1} parent=43 // pred_region
          %330 = dma.done %s323, 1024
        $region60: #{tpu_custom_call.1} parent=43 // pred_fallthru
          _
        %s331 = sand.u32 %s20, 1
        %s332 = scalar_lea.sflag [#allocation3], %s331
        %s333 = sand.u32 %s122, 1
        %s334 = smul.addr %s333, 64
        %s335 = scalar_lea.vmem [#allocation9], %s334
        // Predicated region
        $region61: #{tpu_custom_call.1} parent=43 // pred_check
          %p336 = pneg %p135
        $region62: #{tpu_custom_call.1} parent=43 // pred_check_branch
          %338 = sbr.rel (%p336) target = $region64
        $region63: #{tpu_custom_call.1} parent=43 // pred_region
          %339 = dma.done %s332, 1024
        $region64: #{tpu_custom_call.1} parent=43 // pred_fallthru
          _
        // Predicated region
        $region65: #{tpu_custom_call.1} parent=43 // pred_check
          %p340 = pneg %p156
        $region66: #{tpu_custom_call.1} parent=43 // pred_check_branch
          %342 = sbr.rel (%p340) target = $region68
        $region67: #{tpu_custom_call.1} parent=43 // pred_region
          %343 = dma.done [#allocation6], 640
        $region68: #{tpu_custom_call.1} parent=43 // pred_fallthru
          _
        %p344 = pneg %p36
        %p345 = pneg %p33
        %p346 = pneg %p57
        %p347 = pneg %p54
        %s348 = sand.u32 %s20, 1
        %s349 = scalar_lea.sflag [#allocation3], %s348
        %s350 = sand.u32 %s70, 1
        %s351 = smul.addr %s350, 128
        %s352 = scalar_lea.vmem [#allocation7], %s351
        %p353 = pneg %p83
        %p354 = pneg %p80
        %s355 = sand.u32 %s20, 1
        %s356 = scalar_lea.sflag [#allocation3], %s355
        %s357 = sand.u32 %s96, 1
        %s358 = smul.addr %s357, 64
        %s359 = scalar_lea.vmem [#allocation8], %s358
        %p360 = pneg %p109
        %p361 = pneg %p106
        %s362 = sand.u32 %s20, 1
        %s363 = scalar_lea.sflag [#allocation3], %s362
        %s364 = sand.u32 %s122, 1
        %s365 = smul.addr %s364, 64
        %s366 = scalar_lea.vmem [#allocation9], %s365
        %p367 = pneg %p135
        %p368 = pneg %p132
        %p369 = pneg %p156
        %p370 = pneg %p153
        %p371 = pneg %p177
        %p372 = pneg %p174
        %p374 = scmp.eq.s32.totalorder %s20, 0
        // Predicated region
        $region69: #{tpu_custom_call.1} parent=43 // pred_check
          %p375 = pneg %p374
        $region70: #{tpu_custom_call.1} parent=43 // pred_check_branch
          %377 = sbr.rel (%p375) target = $region72
        $region71: #{tpu_custom_call.1} parent=43 // pred_region
          %v378 = vld [vmem:[#allocation5] sm:$0xff]
          %v379 = vld [vmem:[#allocation5 + $0x8] sm:$0xff]
          %v380 = vld [vmem:[#allocation5 + $0x10] sm:$0xff]
          %v381 = vld [vmem:[#allocation5 + $0x18] sm:$0xff]
          %v382 = vld [vmem:[#allocation5 + $0x20] sm:$0xff]
          %v383 = vld [vmem:[#allocation5 + $0x28] sm:$0xff]
          %v384 = vld [vmem:[#allocation5 + $0x30] sm:$0xff]
          %v385 = vld [vmem:[#allocation5 + $0x38] sm:$0xff]
          %v386 = vld [vmem:[#allocation5 + $0x40] sm:$0xff]
          %v387 = vld [vmem:[#allocation5 + $0x48] sm:$0xff]
          %v388 = vld [vmem:[#allocation5 + $0x50] sm:$0xff]
          %v389 = vld [vmem:[#allocation5 + $0x58] sm:$0xff]
          %v390 = vld [vmem:[#allocation5 + $0x60] sm:$0xff]
          %v391 = vld [vmem:[#allocation5 + $0x68] sm:$0xff]
          %v392 = vld [vmem:[#allocation5 + $0x70] sm:$0xff]
          %v393 = vld [vmem:[#allocation5 + $0x78] sm:$0xff]
          %394 = vst [vmem:[#allocation11] sm:$0xff] %v378
          %395 = vst [vmem:[#allocation11 + $0x8] sm:$0xff] %v379
          %396 = vst [vmem:[#allocation11 + $0x10] sm:$0xff] %v380
          %397 = vst [vmem:[#allocation11 + $0x18] sm:$0xff] %v381
          %398 = vst [vmem:[#allocation11 + $0x20] sm:$0xff] %v382
          %399 = vst [vmem:[#allocation11 + $0x28] sm:$0xff] %v383
          %400 = vst [vmem:[#allocation11 + $0x30] sm:$0xff] %v384
          %401 = vst [vmem:[#allocation11 + $0x38] sm:$0xff] %v385
          %402 = vst [vmem:[#allocation11 + $0x40] sm:$0xff] %v386
          %403 = vst [vmem:[#allocation11 + $0x48] sm:$0xff] %v387
          %404 = vst [vmem:[#allocation11 + $0x50] sm:$0xff] %v388
          %405 = vst [vmem:[#allocation11 + $0x58] sm:$0xff] %v389
          %406 = vst [vmem:[#allocation11 + $0x60] sm:$0xff] %v390
          %407 = vst [vmem:[#allocation11 + $0x68] sm:$0xff] %v391
          %408 = vst [vmem:[#allocation11 + $0x70] sm:$0xff] %v392
          %409 = vst [vmem:[#allocation11 + $0x78] sm:$0xff] %v393
        $region72: #{tpu_custom_call.1} parent=43 // pred_fallthru
          _
        %v410 = vld [vmem:[#allocation11] sm:$0xff]
        %v411 = vld [vmem:[#allocation11 + $0x8] sm:$0xff]
        %v412 = vld [vmem:[#allocation11 + $0x10] sm:$0xff]
        %v413 = vld [vmem:[#allocation11 + $0x18] sm:$0xff]
        %v414 = vld [vmem:[#allocation11 + $0x20] sm:$0xff]
        %v415 = vld [vmem:[#allocation11 + $0x28] sm:$0xff]
        %v416 = vld [vmem:[#allocation11 + $0x30] sm:$0xff]
        %v417 = vld [vmem:[#allocation11 + $0x38] sm:$0xff]
        %v418 = vld [vmem:[#allocation11 + $0x40] sm:$0xff]
        %v419 = vld [vmem:[#allocation11 + $0x48] sm:$0xff]
        %v420 = vld [vmem:[#allocation11 + $0x50] sm:$0xff]
        %v421 = vld [vmem:[#allocation11 + $0x58] sm:$0xff]
        %v422 = vld [vmem:[#allocation11 + $0x60] sm:$0xff]
        %v423 = vld [vmem:[#allocation11 + $0x68] sm:$0xff]
        %v424 = vld [vmem:[#allocation11 + $0x70] sm:$0xff]
        %v425 = vld [vmem:[#allocation11 + $0x78] sm:$0xff]
        %v426 = vld [vmem:[#allocation2] sm:$0xf]
        %v427 = vld [vmem:[#allocation2 + $0x4] sm:$0xf]
        %v428 = vld [vmem:[#allocation2 + $0x8] sm:$0xf]
        %v429 = vld [vmem:[#allocation2 + $0xc] sm:$0xf]
        %v430 = vld [vmem:[#allocation2 + $0x10] sm:$0xf]
        %v431 = vld [vmem:[#allocation2 + $0x14] sm:$0xf]
        %v432 = vld [vmem:[#allocation2 + $0x18] sm:$0xf]
        %v433 = vld [vmem:[#allocation2 + $0x1c] sm:$0xf]
        %v434 = vld [vmem:[#allocation2 + $0x20] sm:$0xf]
        %v435 = vld [vmem:[#allocation2 + $0x24] sm:$0xf]
        %v436 = vld [vmem:[#allocation2 + $0x28] sm:$0xf]
        %v437 = vld [vmem:[#allocation2 + $0x2c] sm:$0xf]
        %v438 = vld [vmem:[#allocation2 + $0x30] sm:$0xf]
        %v439 = vld [vmem:[#allocation2 + $0x34] sm:$0xf]
        %v440 = vld [vmem:[#allocation2 + $0x38] sm:$0xf]
        %v441 = vld [vmem:[#allocation2 + $0x3c] sm:$0xf]
        %v442 = vpack.c.bf16 %v411, %v410
        %v443 = vpack.c.bf16 %v413, %v412
        %v444 = vpack.c.bf16 %v415, %v414
        %v445 = vpack.c.bf16 %v417, %v416
        %v446 = vpack.c.bf16 %v419, %v418
        %v447 = vpack.c.bf16 %v421, %v420
        %v448 = vpack.c.bf16 %v423, %v422
        %v449 = vpack.c.bf16 %v425, %v424
        %v450 = vld [vmem:[%s317] sm:$0xff]
        %v451 = vld [vmem:[%s317 + $0x8] sm:$0xff]
        %v452 = vld [vmem:[%s317 + $0x10] sm:$0xff]
        %v453 = vld [vmem:[%s317 + $0x18] sm:$0xff]
        %v454 = vld [vmem:[%s317 + $0x20] sm:$0xff]
        %v455 = vld [vmem:[%s317 + $0x28] sm:$0xff]
        %v456 = vld [vmem:[%s317 + $0x30] sm:$0xff]
        %v457 = vld [vmem:[%s317 + $0x38] sm:$0xff]
        %v458 = vld [vmem:[%s317 + $0x40] sm:$0xff]
        %v459 = vld [vmem:[%s317 + $0x48] sm:$0xff]
        %v460 = vld [vmem:[%s317 + $0x50] sm:$0xff]
        %v461 = vld [vmem:[%s317 + $0x58] sm:$0xff]
        %v462 = vld [vmem:[%s317 + $0x60] sm:$0xff]
        %v463 = vld [vmem:[%s317 + $0x68] sm:$0xff]
        %v464 = vld [vmem:[%s317 + $0x70] sm:$0xff]
        %v465 = vld [vmem:[%s317 + $0x78] sm:$0xff]
        %v482 = vunpack.c.l.b16 %v426
        %v483 = vunpack.c.l.b16 %v427
        %v484 = vunpack.c.l.b16 %v428
        %v485 = vunpack.c.l.b16 %v429
        %v486 = vunpack.c.l.b16 %v430
        %v487 = vunpack.c.l.b16 %v431
        %v488 = vunpack.c.l.b16 %v432
        %v489 = vunpack.c.l.b16 %v433
        %v490 = vunpack.c.l.b16 %v434
        %v491 = vunpack.c.l.b16 %v435
        %v492 = vunpack.c.l.b16 %v436
        %v493 = vunpack.c.l.b16 %v437
        %v494 = vunpack.c.l.b16 %v438
        %v495 = vunpack.c.l.b16 %v439
        %v496 = vunpack.c.l.b16 %v440
        %v497 = vunpack.c.l.b16 %v441
        %v498 = vpack.c.b16 %v483, %v482
        %v499 = vpack.c.b16 %v485, %v484
        %v500 = vpack.c.b16 %v487, %v486
        %v501 = vpack.c.b16 %v489, %v488
        %v502 = vpack.c.b16 %v491, %v490
        %v503 = vpack.c.b16 %v493, %v492
        %v504 = vpack.c.b16 %v495, %v494
        %v505 = vpack.c.b16 %v497, %v496
        %514 = vmatprep.subr.bf16.mxu0 0
        %515 = vmatpush1.bf16.msra.mxu0 %v449
        %516 = vmatprep.subr.bf16.mxu0 0
        %517 = vmatpush1.bf16.msra.mxu0 %v448
        %518 = vmatprep.subr.bf16.mxu0 0
        %519 = vmatpush1.bf16.msra.mxu0 %v447
        %520 = vmatprep.subr.bf16.mxu0 0
        %521 = vmatpush1.bf16.msra.mxu0 %v446
        %522 = vmatprep.subr.bf16.mxu0 0
        %523 = vmatpush1.bf16.msra.mxu0 %v445
        %524 = vmatprep.subr.bf16.mxu0 0
        %525 = vmatpush1.bf16.msra.mxu0 %v444
        %526 = vmatprep.subr.bf16.mxu0 0
        %527 = vmatpush1.bf16.msra.mxu0 %v443
        %528 = vmatprep.subr.bf16.mxu0 0
        %529 = vmatpush1.bf16.msra.mxu0 %v442
        %530 = vmatprep.subr.bf16.mxu0 0
        %531 = vmatpush2.bf16.msra.mxu0 0
        %532 = vmatprep.subr.bf16.mxu0 0
        %533 = vmatpush2.bf16.msra.mxu0 0
        %534 = vmatprep.subr.bf16.mxu0 0
        %535 = vmatpush2.bf16.msra.mxu0 0
        %536 = vmatprep.subr.bf16.mxu0 0
        %537 = vmatpush2.bf16.msra.mxu0 0
        %538 = vmatprep.subr.bf16.mxu0 0
        %539 = vmatpush2.bf16.msra.mxu0 0
        %540 = vmatprep.subr.bf16.mxu0 0
        %541 = vmatpush2.bf16.msra.mxu0 0
        %542 = vmatprep.subr.bf16.mxu0 0
        %543 = vmatpush2.bf16.msra.mxu0 0
        %544 = vmatprep.subr.bf16.mxu0 0
        %545 = vmatpush2.bf16.msra.mxu0 0
        %546 = vmatprep.mubr.bf16.mxu0 0
        %547 = vmatmul.mubr.bf16.gmra.mxu0 %v498
        %v548 = vpop.f32.mrf.mxu0
        %v549 = vadd.f32 %v450, %v548
        %v550 = vpop.f32.mrf.mxu0
        %v551 = vpop.f32.mrf.mxu0
        %v552 = vadd.f32 %v451, %v551
        %v553 = vpop.f32.mrf.mxu0
        %554 = vmatprep.mubr.bf16.mxu0 0
        %555 = vmatmul.mubr.bf16.gmra.mxu0 %v499
        %v556 = vpop.f32.mrf.mxu0
        %v557 = vadd.f32 %v452, %v556
        %v558 = vpop.f32.mrf.mxu0
        %v559 = vpop.f32.mrf.mxu0
        %v560 = vadd.f32 %v453, %v559
        %v561 = vpop.f32.mrf.mxu0
        %562 = vmatprep.mubr.bf16.mxu0 0
        %563 = vmatmul.mubr.bf16.gmra.mxu0 %v500
        %v564 = vpop.f32.mrf.mxu0
        %v565 = vadd.f32 %v454, %v564
        %v566 = vpop.f32.mrf.mxu0
        %v567 = vpop.f32.mrf.mxu0
        %v568 = vadd.f32 %v455, %v567
        %v569 = vpop.f32.mrf.mxu0
        %570 = vmatprep.mubr.bf16.mxu0 0
        %571 = vmatmul.mubr.bf16.gmra.mxu0 %v501
        %v572 = vpop.f32.mrf.mxu0
        %v573 = vadd.f32 %v456, %v572
        %v574 = vpop.f32.mrf.mxu0
        %v575 = vpop.f32.mrf.mxu0
        %v576 = vadd.f32 %v457, %v575
        %v577 = vpop.f32.mrf.mxu0
        %578 = vmatprep.mubr.bf16.mxu0 0
        %579 = vmatmul.mubr.bf16.gmra.mxu0 %v502
        %v580 = vpop.f32.mrf.mxu0
        %v581 = vadd.f32 %v458, %v580
        %v582 = vpop.f32.mrf.mxu0
        %v583 = vpop.f32.mrf.mxu0
        %v584 = vadd.f32 %v459, %v583
        %v585 = vpop.f32.mrf.mxu0
        %586 = vmatprep.mubr.bf16.mxu0 0
        %587 = vmatmul.mubr.bf16.gmra.mxu0 %v503
        %v588 = vpop.f32.mrf.mxu0
        %v589 = vadd.f32 %v460, %v588
        %v590 = vpop.f32.mrf.mxu0
        %v591 = vpop.f32.mrf.mxu0
        %v592 = vadd.f32 %v461, %v591
        %v593 = vpop.f32.mrf.mxu0
        %594 = vmatprep.mubr.bf16.mxu0 0
        %595 = vmatmul.mubr.bf16.gmra.mxu0 %v504
        %v596 = vpop.f32.mrf.mxu0
        %v597 = vadd.f32 %v462, %v596
        %v598 = vpop.f32.mrf.mxu0
        %v599 = vpop.f32.mrf.mxu0
        %v600 = vadd.f32 %v463, %v599
        %v601 = vpop.f32.mrf.mxu0
        %602 = vmatprep.mubr.bf16.mxu0 0
        %603 = vmatmul.mubr.bf16.gmra.mxu0 %v505
        %v604 = vpop.f32.mrf.mxu0
        %v605 = vadd.f32 %v464, %v604
        %v606 = vpop.f32.mrf.mxu0
        %v607 = vpop.f32.mrf.mxu0
        %v608 = vadd.f32 %v465, %v607
        %v609 = vpop.f32.mrf.mxu0
        %610 = vdwg.mxu0
        %s611 = smul.u32 %s20, 8
        %s612 = scalar_lea.vmem [#allocation10], %s611
        %v613 = vld [vmem:[%s612] sm:$0xff]
        %v614 = vpack.c.bf16 %v552, %v549
        %v615 = vpack.c.bf16 %v560, %v557
        %v616 = vpack.c.bf16 %v568, %v565
        %v617 = vpack.c.bf16 %v576, %v573
        %v618 = vpack.c.bf16 %v584, %v581
        %v619 = vpack.c.bf16 %v592, %v589
        %v620 = vpack.c.bf16 %v600, %v597
        %v621 = vpack.c.bf16 %v608, %v605
        %v622 = vld [vmem:[%s326] sm:$0xf]
        %v623 = vld [vmem:[%s326 + $0x4] sm:$0xf]
        %v624 = vld [vmem:[%s326 + $0x8] sm:$0xf]
        %v625 = vld [vmem:[%s326 + $0xc] sm:$0xf]
        %v626 = vld [vmem:[%s326 + $0x10] sm:$0xf]
        %v627 = vld [vmem:[%s326 + $0x14] sm:$0xf]
        %v628 = vld [vmem:[%s326 + $0x18] sm:$0xf]
        %v629 = vld [vmem:[%s326 + $0x1c] sm:$0xf]
        %v630 = vld [vmem:[%s326 + $0x20] sm:$0xf]
        %v631 = vld [vmem:[%s326 + $0x24] sm:$0xf]
        %v632 = vld [vmem:[%s326 + $0x28] sm:$0xf]
        %v633 = vld [vmem:[%s326 + $0x2c] sm:$0xf]
        %v634 = vld [vmem:[%s326 + $0x30] sm:$0xf]
        %v635 = vld [vmem:[%s326 + $0x34] sm:$0xf]
        %v636 = vld [vmem:[%s326 + $0x38] sm:$0xf]
        %v637 = vld [vmem:[%s326 + $0x3c] sm:$0xf]
        %v638 = vlaneseq
        %v639 = vshrl.u32 %v638, 7
        %v640 = vsub.s32 0, %v639
        %v641 = vrot.slane %v613, %v640
        %v658 = vunpack.c.l.b16 %v622
        %v659 = vunpack.c.l.b16 %v623
        %v660 = vunpack.c.l.b16 %v624
        %v661 = vunpack.c.l.b16 %v625
        %v662 = vunpack.c.l.b16 %v626
        %v663 = vunpack.c.l.b16 %v627
        %v664 = vunpack.c.l.b16 %v628
        %v665 = vunpack.c.l.b16 %v629
        %v666 = vunpack.c.l.b16 %v630
        %v667 = vunpack.c.l.b16 %v631
        %v668 = vunpack.c.l.b16 %v632
        %v669 = vunpack.c.l.b16 %v633
        %v670 = vunpack.c.l.b16 %v634
        %v671 = vunpack.c.l.b16 %v635
        %v672 = vunpack.c.l.b16 %v636
        %v673 = vunpack.c.l.b16 %v637
        %v674 = vpack.c.b16 %v659, %v658
        %v675 = vpack.c.b16 %v661, %v660
        %v676 = vpack.c.b16 %v663, %v662
        %v677 = vpack.c.b16 %v665, %v664
        %v678 = vpack.c.b16 %v667, %v666
        %v679 = vpack.c.b16 %v669, %v668
        %v680 = vpack.c.b16 %v671, %v670
        %v681 = vpack.c.b16 %v673, %v672
        %690 = vmatprep.subr.bf16.mxu0 0
        %691 = vmatpush1.bf16.msra.mxu0 %v681
        %692 = vmatprep.subr.bf16.mxu0 0
        %693 = vmatpush1.bf16.msra.mxu0 %v680
        %694 = vmatprep.subr.bf16.mxu0 0
        %695 = vmatpush1.bf16.msra.mxu0 %v679
        %696 = vmatprep.subr.bf16.mxu0 0
        %697 = vmatpush1.bf16.msra.mxu0 %v678
        %698 = vmatprep.subr.bf16.mxu0 0
        %699 = vmatpush1.bf16.msra.mxu0 %v677
        %700 = vmatprep.subr.bf16.mxu0 0
        %701 = vmatpush1.bf16.msra.mxu0 %v676
        %702 = vmatprep.subr.bf16.mxu0 0
        %703 = vmatpush1.bf16.msra.mxu0 %v675
        %704 = vmatprep.subr.bf16.mxu0 0
        %705 = vmatpush1.bf16.msra.mxu0 %v674
        %706 = vmatprep.subr.bf16.mxu0 0
        %707 = vmatpush2.bf16.msra.mxu0 0
        %708 = vmatprep.subr.bf16.mxu0 0
        %709 = vmatpush2.bf16.msra.mxu0 0
        %710 = vmatprep.subr.bf16.mxu0 0
        %711 = vmatpush2.bf16.msra.mxu0 0
        %712 = vmatprep.subr.bf16.mxu0 0
        %713 = vmatpush2.bf16.msra.mxu0 0
        %714 = vmatprep.subr.bf16.mxu0 0
        %715 = vmatpush2.bf16.msra.mxu0 0
        %716 = vmatprep.subr.bf16.mxu0 0
        %717 = vmatpush2.bf16.msra.mxu0 0
        %718 = vmatprep.subr.bf16.mxu0 0
        %719 = vmatpush2.bf16.msra.mxu0 0
        %720 = vmatprep.subr.bf16.mxu0 0
        %721 = vmatpush2.bf16.msra.mxu0 0
        %722 = vmatprep.mubr.bf16.mxu0 0
        %723 = vmatmul.mubr.bf16.gmra.mxu0 %v614
        %v724 = vpop.f32.mrf.mxu0
        %v725 = vadd.f32 %v641, %v724
        %v726 = vpop.f32.mrf.mxu0
        %v727 = vpop.f32.mrf.mxu0
        %v728 = vadd.f32 %v641, %v727
        %v729 = vpop.f32.mrf.mxu0
        %730 = vmatprep.mubr.bf16.mxu0 0
        %731 = vmatmul.mubr.bf16.gmra.mxu0 %v615
        %v732 = vpop.f32.mrf.mxu0
        %v733 = vadd.f32 %v641, %v732
        %v734 = vpop.f32.mrf.mxu0
        %v735 = vpop.f32.mrf.mxu0
        %v736 = vadd.f32 %v641, %v735
        %v737 = vpop.f32.mrf.mxu0
        %738 = vmatprep.mubr.bf16.mxu0 0
        %739 = vmatmul.mubr.bf16.gmra.mxu0 %v616
        %v740 = vpop.f32.mrf.mxu0
        %v741 = vadd.f32 %v641, %v740
        %v742 = vpop.f32.mrf.mxu0
        %v743 = vpop.f32.mrf.mxu0
        %v744 = vadd.f32 %v641, %v743
        %v745 = vpop.f32.mrf.mxu0
        %746 = vmatprep.mubr.bf16.mxu0 0
        %747 = vmatmul.mubr.bf16.gmra.mxu0 %v617
        %v748 = vpop.f32.mrf.mxu0
        %v749 = vadd.f32 %v641, %v748
        %v750 = vpop.f32.mrf.mxu0
        %v751 = vpop.f32.mrf.mxu0
        %v752 = vadd.f32 %v641, %v751
        %v753 = vpop.f32.mrf.mxu0
        %754 = vmatprep.mubr.bf16.mxu0 0
        %755 = vmatmul.mubr.bf16.gmra.mxu0 %v618
        %v756 = vpop.f32.mrf.mxu0
        %v757 = vadd.f32 %v641, %v756
        %v758 = vpop.f32.mrf.mxu0
        %v759 = vpop.f32.mrf.mxu0
        %v760 = vadd.f32 %v641, %v759
        %v761 = vpop.f32.mrf.mxu0
        %762 = vmatprep.mubr.bf16.mxu0 0
        %763 = vmatmul.mubr.bf16.gmra.mxu0 %v619
        %v764 = vpop.f32.mrf.mxu0
        %v765 = vadd.f32 %v641, %v764
        %v766 = vpop.f32.mrf.mxu0
        %v767 = vpop.f32.mrf.mxu0
        %v768 = vadd.f32 %v641, %v767
        %v769 = vpop.f32.mrf.mxu0
        %770 = vmatprep.mubr.bf16.mxu0 0
        %771 = vmatmul.mubr.bf16.gmra.mxu0 %v620
        %v772 = vpop.f32.mrf.mxu0
        %v773 = vadd.f32 %v641, %v772
        %v774 = vpop.f32.mrf.mxu0
        %v775 = vpop.f32.mrf.mxu0
        %v776 = vadd.f32 %v641, %v775
        %v777 = vpop.f32.mrf.mxu0
        %778 = vmatprep.mubr.bf16.mxu0 0
        %779 = vmatmul.mubr.bf16.gmra.mxu0 %v621
        %v780 = vpop.f32.mrf.mxu0
        %v781 = vadd.f32 %v641, %v780
        %v782 = vpop.f32.mrf.mxu0
        %v783 = vpop.f32.mrf.mxu0
        %v784 = vadd.f32 %v641, %v783
        %v785 = vpop.f32.mrf.mxu0
        %786 = vdwg.mxu0
        %v787 = vmax.f32 %v725, 0.0
        %v788 = vmax.f32 %v728, 0.0
        %v789 = vmax.f32 %v733, 0.0
        %v790 = vmax.f32 %v736, 0.0
        %v791 = vmax.f32 %v741, 0.0
        %v792 = vmax.f32 %v744, 0.0
        %v793 = vmax.f32 %v749, 0.0
        %v794 = vmax.f32 %v752, 0.0
        %v795 = vmax.f32 %v757, 0.0
        %v796 = vmax.f32 %v760, 0.0
        %v797 = vmax.f32 %v765, 0.0
        %v798 = vmax.f32 %v768, 0.0
        %v799 = vmax.f32 %v773, 0.0
        %v800 = vmax.f32 %v776, 0.0
        %v801 = vmax.f32 %v781, 0.0
        %v802 = vmax.f32 %v784, 0.0
        %v803 = vpack.c.bf16 %v788, %v787
        %v804 = vpack.c.bf16 %v790, %v789
        %v805 = vpack.c.bf16 %v792, %v791
        %v806 = vpack.c.bf16 %v794, %v793
        %v807 = vpack.c.bf16 %v796, %v795
        %v808 = vpack.c.bf16 %v798, %v797
        %v809 = vpack.c.bf16 %v800, %v799
        %v810 = vpack.c.bf16 %v802, %v801
        %v811 = vld [vmem:[%s335] sm:$0xf]
        %v812 = vld [vmem:[%s335 + $0x4] sm:$0xf]
        %v813 = vld [vmem:[%s335 + $0x8] sm:$0xf]
        %v814 = vld [vmem:[%s335 + $0xc] sm:$0xf]
        %v815 = vld [vmem:[%s335 + $0x10] sm:$0xf]
        %v816 = vld [vmem:[%s335 + $0x14] sm:$0xf]
        %v817 = vld [vmem:[%s335 + $0x18] sm:$0xf]
        %v818 = vld [vmem:[%s335 + $0x1c] sm:$0xf]
        %v819 = vld [vmem:[%s335 + $0x20] sm:$0xf]
        %v820 = vld [vmem:[%s335 + $0x24] sm:$0xf]
        %v821 = vld [vmem:[%s335 + $0x28] sm:$0xf]
        %v822 = vld [vmem:[%s335 + $0x2c] sm:$0xf]
        %v823 = vld [vmem:[%s335 + $0x30] sm:$0xf]
        %v824 = vld [vmem:[%s335 + $0x34] sm:$0xf]
        %v825 = vld [vmem:[%s335 + $0x38] sm:$0xf]
        %v826 = vld [vmem:[%s335 + $0x3c] sm:$0xf]
        %v827 = vlaneseq
        %v828 = vshrl.u32 %v827, 7
        %v829 = vsub.s32 1, %v828
        %v830 = vrot.slane %v613, %v829
        %v847 = vunpack.c.l.b16 %v811
        %v848 = vunpack.c.l.b16 %v812
        %v849 = vunpack.c.l.b16 %v813
        %v850 = vunpack.c.l.b16 %v814
        %v851 = vunpack.c.l.b16 %v815
        %v852 = vunpack.c.l.b16 %v816
        %v853 = vunpack.c.l.b16 %v817
        %v854 = vunpack.c.l.b16 %v818
        %v855 = vunpack.c.l.b16 %v819
        %v856 = vunpack.c.l.b16 %v820
        %v857 = vunpack.c.l.b16 %v821
        %v858 = vunpack.c.l.b16 %v822
        %v859 = vunpack.c.l.b16 %v823
        %v860 = vunpack.c.l.b16 %v824
        %v861 = vunpack.c.l.b16 %v825
        %v862 = vunpack.c.l.b16 %v826
        %v863 = vpack.c.b16 %v848, %v847
        %v864 = vpack.c.b16 %v850, %v849
        %v865 = vpack.c.b16 %v852, %v851
        %v866 = vpack.c.b16 %v854, %v853
        %v867 = vpack.c.b16 %v856, %v855
        %v868 = vpack.c.b16 %v858, %v857
        %v869 = vpack.c.b16 %v860, %v859
        %v870 = vpack.c.b16 %v862, %v861
        %879 = vmatprep.subr.bf16.mxu0 0
        %880 = vmatpush1.bf16.msra.mxu0 %v870
        %881 = vmatprep.subr.bf16.mxu0 0
        %882 = vmatpush1.bf16.msra.mxu0 %v869
        %883 = vmatprep.subr.bf16.mxu0 0
        %884 = vmatpush1.bf16.msra.mxu0 %v868
        %885 = vmatprep.subr.bf16.mxu0 0
        %886 = vmatpush1.bf16.msra.mxu0 %v867
        %887 = vmatprep.subr.bf16.mxu0 0
        %888 = vmatpush1.bf16.msra.mxu0 %v866
        %889 = vmatprep.subr.bf16.mxu0 0
        %890 = vmatpush1.bf16.msra.mxu0 %v865
        %891 = vmatprep.subr.bf16.mxu0 0
        %892 = vmatpush1.bf16.msra.mxu0 %v864
        %893 = vmatprep.subr.bf16.mxu0 0
        %894 = vmatpush1.bf16.msra.mxu0 %v863
        %895 = vmatprep.subr.bf16.mxu0 0
        %896 = vmatpush2.bf16.msra.mxu0 0
        %897 = vmatprep.subr.bf16.mxu0 0
        %898 = vmatpush2.bf16.msra.mxu0 0
        %899 = vmatprep.subr.bf16.mxu0 0
        %900 = vmatpush2.bf16.msra.mxu0 0
        %901 = vmatprep.subr.bf16.mxu0 0
        %902 = vmatpush2.bf16.msra.mxu0 0
        %903 = vmatprep.subr.bf16.mxu0 0
        %904 = vmatpush2.bf16.msra.mxu0 0
        %905 = vmatprep.subr.bf16.mxu0 0
        %906 = vmatpush2.bf16.msra.mxu0 0
        %907 = vmatprep.subr.bf16.mxu0 0
        %908 = vmatpush2.bf16.msra.mxu0 0
        %909 = vmatprep.subr.bf16.mxu0 0
        %910 = vmatpush2.bf16.msra.mxu0 0
        %911 = vmatprep.mubr.bf16.mxu0 0
        %912 = vmatmul.mubr.bf16.gmra.mxu0 %v803
        %v913 = vpop.f32.mrf.mxu0
        %v914 = vadd.f32 %v830, %v913
        %v915 = vpop.f32.mrf.mxu0
        %v916 = vpop.f32.mrf.mxu0
        %v917 = vadd.f32 %v830, %v916
        %v918 = vpop.f32.mrf.mxu0
        %919 = vmatprep.mubr.bf16.mxu0 0
        %920 = vmatmul.mubr.bf16.gmra.mxu0 %v804
        %v921 = vpop.f32.mrf.mxu0
        %v922 = vadd.f32 %v830, %v921
        %v923 = vpop.f32.mrf.mxu0
        %v924 = vpop.f32.mrf.mxu0
        %v925 = vadd.f32 %v830, %v924
        %v926 = vpop.f32.mrf.mxu0
        %927 = vmatprep.mubr.bf16.mxu0 0
        %928 = vmatmul.mubr.bf16.gmra.mxu0 %v805
        %v929 = vpop.f32.mrf.mxu0
        %v930 = vadd.f32 %v830, %v929
        %v931 = vpop.f32.mrf.mxu0
        %v932 = vpop.f32.mrf.mxu0
        %v933 = vadd.f32 %v830, %v932
        %v934 = vpop.f32.mrf.mxu0
        %935 = vmatprep.mubr.bf16.mxu0 0
        %936 = vmatmul.mubr.bf16.gmra.mxu0 %v806
        %v937 = vpop.f32.mrf.mxu0
        %v938 = vadd.f32 %v830, %v937
        %v939 = vpop.f32.mrf.mxu0
        %v940 = vpop.f32.mrf.mxu0
        %v941 = vadd.f32 %v830, %v940
        %v942 = vpop.f32.mrf.mxu0
        %943 = vmatprep.mubr.bf16.mxu0 0
        %944 = vmatmul.mubr.bf16.gmra.mxu0 %v807
        %v945 = vpop.f32.mrf.mxu0
        %v946 = vadd.f32 %v830, %v945
        %v947 = vpop.f32.mrf.mxu0
        %v948 = vpop.f32.mrf.mxu0
        %v949 = vadd.f32 %v830, %v948
        %v950 = vpop.f32.mrf.mxu0
        %951 = vmatprep.mubr.bf16.mxu0 0
        %952 = vmatmul.mubr.bf16.gmra.mxu0 %v808
        %v953 = vpop.f32.mrf.mxu0
        %v954 = vadd.f32 %v830, %v953
        %v955 = vpop.f32.mrf.mxu0
        %v956 = vpop.f32.mrf.mxu0
        %v957 = vadd.f32 %v830, %v956
        %v958 = vpop.f32.mrf.mxu0
        %959 = vmatprep.mubr.bf16.mxu0 0
        %960 = vmatmul.mubr.bf16.gmra.mxu0 %v809
        %v961 = vpop.f32.mrf.mxu0
        %v962 = vadd.f32 %v830, %v961
        %v963 = vpop.f32.mrf.mxu0
        %v964 = vpop.f32.mrf.mxu0
        %v965 = vadd.f32 %v830, %v964
        %v966 = vpop.f32.mrf.mxu0
        %967 = vmatprep.mubr.bf16.mxu0 0
        %968 = vmatmul.mubr.bf16.gmra.mxu0 %v810
        %v969 = vpop.f32.mrf.mxu0
        %v970 = vadd.f32 %v830, %v969
        %v971 = vpop.f32.mrf.mxu0
        %v972 = vpop.f32.mrf.mxu0
        %v973 = vadd.f32 %v830, %v972
        %v974 = vpop.f32.mrf.mxu0
        %975 = vdwg.mxu0
        %v976 = vlaneseq
        %v977 = vshrl.u32 %v976, 7
        %v978 = vadd.s32 %v977, 8
        %v979 = vadd.s32 %v977, 16
        %v980 = vadd.s32 %v977, 24
        %v981 = vadd.s32 %v977, 32
        %v982 = vadd.s32 %v977, 40
        %v983 = vadd.s32 %v977, 48
        %v984 = vadd.s32 %v977, 56
        %v985 = vadd.s32 %v977, 64
        %v986 = vadd.s32 %v977, 72
        %v987 = vadd.s32 %v977, 80
        %v988 = vadd.s32 %v977, 88
        %v989 = vadd.s32 %v977, 96
        %v990 = vadd.s32 %v977, 104
        %v991 = vadd.s32 %v977, 112
        %v992 = vadd.s32 %v977, 120
        %vm993 = vcmp.lt.s32.totalorder %v977, 16
        %vm994 = vcmp.lt.s32.totalorder %v978, 16
        %vm995 = vcmp.lt.s32.totalorder %v979, 16
        %vm996 = vcmp.lt.s32.totalorder %v980, 16
        %vm997 = vcmp.lt.s32.totalorder %v981, 16
        %vm998 = vcmp.lt.s32.totalorder %v982, 16
        %vm999 = vcmp.lt.s32.totalorder %v983, 16
        %vm1000 = vcmp.lt.s32.totalorder %v984, 16
        %vm1001 = vcmp.lt.s32.totalorder %v985, 16
        %vm1002 = vcmp.lt.s32.totalorder %v986, 16
        %vm1003 = vcmp.lt.s32.totalorder %v987, 16
        %vm1004 = vcmp.lt.s32.totalorder %v988, 16
        %vm1005 = vcmp.lt.s32.totalorder %v989, 16
        %vm1006 = vcmp.lt.s32.totalorder %v990, 16
        %vm1007 = vcmp.lt.s32.totalorder %v991, 16
        %vm1008 = vcmp.lt.s32.totalorder %v992, 16
        %v1009 = vsel %vm993, 1, 0
        %v1010 = vsel %vm994, 1, 0
        %v1011 = vsel %vm995, 1, 0
        %v1012 = vsel %vm996, 1, 0
        %v1013 = vsel %vm997, 1, 0
        %v1014 = vsel %vm998, 1, 0
        %v1015 = vsel %vm999, 1, 0
        %v1016 = vsel %vm1000, 1, 0
        %v1017 = vsel %vm1001, 1, 0
        %v1018 = vsel %vm1002, 1, 0
        %v1019 = vsel %vm1003, 1, 0
        %v1020 = vsel %vm1004, 1, 0
        %v1021 = vsel %vm1005, 1, 0
        %v1022 = vsel %vm1006, 1, 0
        %v1023 = vsel %vm1007, 1, 0
        %v1024 = vsel %vm1008, 1, 0
        %v1025 = vcvt.s32.f32 %v1009
        %v1026 = vcvt.s32.f32 %v1010
        %v1027 = vcvt.s32.f32 %v1011
        %v1028 = vcvt.s32.f32 %v1012
        %v1029 = vcvt.s32.f32 %v1013
        %v1030 = vcvt.s32.f32 %v1014
        %v1031 = vcvt.s32.f32 %v1015
        %v1032 = vcvt.s32.f32 %v1016
        %v1033 = vcvt.s32.f32 %v1017
        %v1034 = vcvt.s32.f32 %v1018
        %v1035 = vcvt.s32.f32 %v1019
        %v1036 = vcvt.s32.f32 %v1020
        %v1037 = vcvt.s32.f32 %v1021
        %v1038 = vcvt.s32.f32 %v1022
        %v1039 = vcvt.s32.f32 %v1023
        %v1040 = vcvt.s32.f32 %v1024
        %v1041 = vmul.f32 %v914, %v1025
        %v1042 = vmul.f32 %v917, %v1026
        %v1043 = vmul.f32 %v922, %v1027
        %v1044 = vmul.f32 %v925, %v1028
        %v1045 = vmul.f32 %v930, %v1029
        %v1046 = vmul.f32 %v933, %v1030
        %v1047 = vmul.f32 %v938, %v1031
        %v1048 = vmul.f32 %v941, %v1032
        %v1049 = vmul.f32 %v946, %v1033
        %v1050 = vmul.f32 %v949, %v1034
        %v1051 = vmul.f32 %v954, %v1035
        %v1052 = vmul.f32 %v957, %v1036
        %v1053 = vmul.f32 %v962, %v1037
        %v1054 = vmul.f32 %v965, %v1038
        %v1055 = vmul.f32 %v970, %v1039
        %v1056 = vmul.f32 %v973, %v1040
        %v1057 = vadd.f32 %v1041, %v1042
        %v1058 = vadd.f32 %v1057, %v1043
        %v1059 = vadd.f32 %v1058, %v1044
        %v1060 = vadd.f32 %v1059, %v1045
        %v1061 = vadd.f32 %v1060, %v1046
        %v1062 = vadd.f32 %v1061, %v1047
        %v1063 = vadd.f32 %v1062, %v1048
        %v1064 = vadd.f32 %v1063, %v1049
        %v1065 = vadd.f32 %v1064, %v1050
        %v1066 = vadd.f32 %v1065, %v1051
        %v1067 = vadd.f32 %v1066, %v1052
        %v1068 = vadd.f32 %v1067, %v1053
        %v1069 = vadd.f32 %v1068, %v1054
        %v1070 = vadd.f32 %v1069, %v1055
        %v1071 = vadd.f32 %v1070, %v1056
        %v1072 = vrot.slane %v1071, 4
        %v1073 = vadd.f32 %v1071, %v1072
        %v1074 = vrot.slane %v1073, 2
        %v1075 = vadd.f32 %v1073, %v1074
        %v1076 = vrot.slane %v1075, 1
        %v1077 = vadd.f32 %v1075, %v1076
        %v1078 = vmul.f32 %v1077, 0.0625
        %v1079 = vsub.f32 %v914, %v1078
        %v1080 = vsub.f32 %v917, %v1078
        %v1081 = vsub.f32 %v922, %v1078
        %v1082 = vsub.f32 %v925, %v1078
        %v1083 = vsub.f32 %v930, %v1078
        %v1084 = vsub.f32 %v933, %v1078
        %v1085 = vsub.f32 %v938, %v1078
        %v1086 = vsub.f32 %v941, %v1078
        %v1087 = vsub.f32 %v946, %v1078
        %v1088 = vsub.f32 %v949, %v1078
        %v1089 = vsub.f32 %v954, %v1078
        %v1090 = vsub.f32 %v957, %v1078
        %v1091 = vsub.f32 %v962, %v1078
        %v1092 = vsub.f32 %v965, %v1078
        %v1093 = vsub.f32 %v970, %v1078
        %v1094 = vsub.f32 %v973, %v1078
        %v1095 = vmul.f32 %v1079, %v1079
        %v1096 = vmul.f32 %v1080, %v1080
        %v1097 = vmul.f32 %v1081, %v1081
        %v1098 = vmul.f32 %v1082, %v1082
        %v1099 = vmul.f32 %v1083, %v1083
        %v1100 = vmul.f32 %v1084, %v1084
        %v1101 = vmul.f32 %v1085, %v1085
        %v1102 = vmul.f32 %v1086, %v1086
        %v1103 = vmul.f32 %v1087, %v1087
        %v1104 = vmul.f32 %v1088, %v1088
        %v1105 = vmul.f32 %v1089, %v1089
        %v1106 = vmul.f32 %v1090, %v1090
        %v1107 = vmul.f32 %v1091, %v1091
        %v1108 = vmul.f32 %v1092, %v1092
        %v1109 = vmul.f32 %v1093, %v1093
        %v1110 = vmul.f32 %v1094, %v1094
        %v1111 = vmul.f32 %v1095, %v1025
        %v1112 = vmul.f32 %v1096, %v1026
        %v1113 = vmul.f32 %v1097, %v1027
        %v1114 = vmul.f32 %v1098, %v1028
        %v1115 = vmul.f32 %v1099, %v1029
        %v1116 = vmul.f32 %v1100, %v1030
        %v1117 = vmul.f32 %v1101, %v1031
        %v1118 = vmul.f32 %v1102, %v1032
        %v1119 = vmul.f32 %v1103, %v1033
        %v1120 = vmul.f32 %v1104, %v1034
        %v1121 = vmul.f32 %v1105, %v1035
        %v1122 = vmul.f32 %v1106, %v1036
        %v1123 = vmul.f32 %v1107, %v1037
        %v1124 = vmul.f32 %v1108, %v1038
        %v1125 = vmul.f32 %v1109, %v1039
        %v1126 = vmul.f32 %v1110, %v1040
        %v1127 = vadd.f32 %v1111, %v1112
        %v1128 = vadd.f32 %v1127, %v1113
        %v1129 = vadd.f32 %v1128, %v1114
        %v1130 = vadd.f32 %v1129, %v1115
        %v1131 = vadd.f32 %v1130, %v1116
        %v1132 = vadd.f32 %v1131, %v1117
        %v1133 = vadd.f32 %v1132, %v1118
        %v1134 = vadd.f32 %v1133, %v1119
        %v1135 = vadd.f32 %v1134, %v1120
        %v1136 = vadd.f32 %v1135, %v1121
        %v1137 = vadd.f32 %v1136, %v1122
        %v1138 = vadd.f32 %v1137, %v1123
        %v1139 = vadd.f32 %v1138, %v1124
        %v1140 = vadd.f32 %v1139, %v1125
        %v1141 = vadd.f32 %v1140, %v1126
        %v1142 = vrot.slane %v1141, 4
        %v1143 = vadd.f32 %v1141, %v1142
        %v1144 = vrot.slane %v1143, 2
        %v1145 = vadd.f32 %v1143, %v1144
        %v1146 = vrot.slane %v1145, 1
        %v1147 = vadd.f32 %v1145, %v1146
        %v1148 = vmul.f32 %v1147, 0.0625
        %v1149 = vlaneseq
        %v1150 = vshrl.u32 %v1149, 7
        %v1151 = vsub.s32 2, %v1150
        %v1152 = vrot.slane %v613, %v1151
        %v1153 = vmul.f32 %v1152, %v1079
        %v1154 = vmul.f32 %v1152, %v1080
        %v1155 = vmul.f32 %v1152, %v1081
        %v1156 = vmul.f32 %v1152, %v1082
        %v1157 = vmul.f32 %v1152, %v1083
        %v1158 = vmul.f32 %v1152, %v1084
        %v1159 = vmul.f32 %v1152, %v1085
        %v1160 = vmul.f32 %v1152, %v1086
        %v1161 = vmul.f32 %v1152, %v1087
        %v1162 = vmul.f32 %v1152, %v1088
        %v1163 = vmul.f32 %v1152, %v1089
        %v1164 = vmul.f32 %v1152, %v1090
        %v1165 = vmul.f32 %v1152, %v1091
        %v1166 = vmul.f32 %v1152, %v1092
        %v1167 = vmul.f32 %v1152, %v1093
        %v1168 = vmul.f32 %v1152, %v1094
        %v1169 = vadd.f32 %v1148, 1e-05
        %v1170 = vrsqrt.pop %v1169
        %v1171 = vmul.f32 %v1153, %v1170
        %v1172 = vmul.f32 %v1154, %v1170
        %v1173 = vmul.f32 %v1155, %v1170
        %v1174 = vmul.f32 %v1156, %v1170
        %v1175 = vmul.f32 %v1157, %v1170
        %v1176 = vmul.f32 %v1158, %v1170
        %v1177 = vmul.f32 %v1159, %v1170
        %v1178 = vmul.f32 %v1160, %v1170
        %v1179 = vmul.f32 %v1161, %v1170
        %v1180 = vmul.f32 %v1162, %v1170
        %v1181 = vmul.f32 %v1163, %v1170
        %v1182 = vmul.f32 %v1164, %v1170
        %v1183 = vmul.f32 %v1165, %v1170
        %v1184 = vmul.f32 %v1166, %v1170
        %v1185 = vmul.f32 %v1167, %v1170
        %v1186 = vmul.f32 %v1168, %v1170
        %v1187 = vlaneseq
        %v1188 = vshrl.u32 %v1187, 7
        %v1189 = vsub.s32 3, %v1188
        %v1190 = vrot.slane %v613, %v1189
        %v1191 = vadd.f32 %v1171, %v1190
        %v1192 = vadd.f32 %v1172, %v1190
        %v1193 = vadd.f32 %v1173, %v1190
        %v1194 = vadd.f32 %v1174, %v1190
        %v1195 = vadd.f32 %v1175, %v1190
        %v1196 = vadd.f32 %v1176, %v1190
        %v1197 = vadd.f32 %v1177, %v1190
        %v1198 = vadd.f32 %v1178, %v1190
        %v1199 = vadd.f32 %v1179, %v1190
        %v1200 = vadd.f32 %v1180, %v1190
        %v1201 = vadd.f32 %v1181, %v1190
        %v1202 = vadd.f32 %v1182, %v1190
        %v1203 = vadd.f32 %v1183, %v1190
        %v1204 = vadd.f32 %v1184, %v1190
        %v1205 = vadd.f32 %v1185, %v1190
        %v1206 = vadd.f32 %v1186, %v1190
        %p1207 = scmp.lt.s32.totalorder %s20, 4
        // Predicated region
        $region73: #{tpu_custom_call.1} parent=43 // pred_check
          %p1208 = pneg %p1207
        $region74: #{tpu_custom_call.1} parent=43 // pred_check_branch
          %1210 = sbr.rel (%p1208) target = $region76
        $region75: #{tpu_custom_call.1} parent=43 // pred_region
          %v1211 = vmax.f32 %v1191, 0.0
          %v1212 = vmax.f32 %v1192, 0.0
          %v1213 = vmax.f32 %v1193, 0.0
          %v1214 = vmax.f32 %v1194, 0.0
          %v1215 = vmax.f32 %v1195, 0.0
          %v1216 = vmax.f32 %v1196, 0.0
          %v1217 = vmax.f32 %v1197, 0.0
          %v1218 = vmax.f32 %v1198, 0.0
          %v1219 = vmax.f32 %v1199, 0.0
          %v1220 = vmax.f32 %v1200, 0.0
          %v1221 = vmax.f32 %v1201, 0.0
          %v1222 = vmax.f32 %v1202, 0.0
          %v1223 = vmax.f32 %v1203, 0.0
          %v1224 = vmax.f32 %v1204, 0.0
          %v1225 = vmax.f32 %v1205, 0.0
          %v1226 = vmax.f32 %v1206, 0.0
          %1227 = vst [vmem:[#allocation11] sm:$0xff] %v1211
          %1228 = vst [vmem:[#allocation11 + $0x8] sm:$0xff] %v1212
          %1229 = vst [vmem:[#allocation11 + $0x10] sm:$0xff] %v1213
          %1230 = vst [vmem:[#allocation11 + $0x18] sm:$0xff] %v1214
          %1231 = vst [vmem:[#allocation11 + $0x20] sm:$0xff] %v1215
          %1232 = vst [vmem:[#allocation11 + $0x28] sm:$0xff] %v1216
          %1233 = vst [vmem:[#allocation11 + $0x30] sm:$0xff] %v1217
          %1234 = vst [vmem:[#allocation11 + $0x38] sm:$0xff] %v1218
          %1235 = vst [vmem:[#allocation11 + $0x40] sm:$0xff] %v1219
          %1236 = vst [vmem:[#allocation11 + $0x48] sm:$0xff] %v1220
          %1237 = vst [vmem:[#allocation11 + $0x50] sm:$0xff] %v1221
          %1238 = vst [vmem:[#allocation11 + $0x58] sm:$0xff] %v1222
          %1239 = vst [vmem:[#allocation11 + $0x60] sm:$0xff] %v1223
          %1240 = vst [vmem:[#allocation11 + $0x68] sm:$0xff] %v1224
          %1241 = vst [vmem:[#allocation11 + $0x70] sm:$0xff] %v1225
          %1242 = vst [vmem:[#allocation11 + $0x78] sm:$0xff] %v1226
        $region76: #{tpu_custom_call.1} parent=43 // pred_fallthru
          _
        %p1243 = scmp.eq.s32.totalorder %s20, 4
        // Predicated region
        $region77: #{tpu_custom_call.1} parent=43 // pred_check
          %p1244 = pneg %p1243
        $region78: #{tpu_custom_call.1} parent=43 // pred_check_branch
          %1246 = sbr.rel (%p1244) target = $region80
        $region79: #{tpu_custom_call.1} parent=43 // pred_region
          %1247 = vst [vmem:[#allocation11] sm:$0xff] %v1191
          %1248 = vst [vmem:[#allocation11 + $0x8] sm:$0xff] %v1192
          %1249 = vst [vmem:[#allocation11 + $0x10] sm:$0xff] %v1193
          %1250 = vst [vmem:[#allocation11 + $0x18] sm:$0xff] %v1194
          %1251 = vst [vmem:[#allocation11 + $0x20] sm:$0xff] %v1195
          %1252 = vst [vmem:[#allocation11 + $0x28] sm:$0xff] %v1196
          %1253 = vst [vmem:[#allocation11 + $0x30] sm:$0xff] %v1197
          %1254 = vst [vmem:[#allocation11 + $0x38] sm:$0xff] %v1198
          %1255 = vst [vmem:[#allocation11 + $0x40] sm:$0xff] %v1199
          %1256 = vst [vmem:[#allocation11 + $0x48] sm:$0xff] %v1200
          %1257 = vst [vmem:[#allocation11 + $0x50] sm:$0xff] %v1201
          %1258 = vst [vmem:[#allocation11 + $0x58] sm:$0xff] %v1202
          %1259 = vst [vmem:[#allocation11 + $0x60] sm:$0xff] %v1203
          %1260 = vst [vmem:[#allocation11 + $0x68] sm:$0xff] %v1204
          %1261 = vst [vmem:[#allocation11 + $0x70] sm:$0xff] %v1205
          %1262 = vst [vmem:[#allocation11 + $0x78] sm:$0xff] %v1206
        $region80: #{tpu_custom_call.1} parent=43 // pred_fallthru
          _
        // Predicated region
        $region81: #{tpu_custom_call.1} parent=43 // pred_check
          %p1263 = pneg %p174
        $region82: #{tpu_custom_call.1} parent=43 // pred_check_branch
          %1265 = sbr.rel (%p1263) target = $region84
        $region83: #{tpu_custom_call.1} parent=43 // pred_region
          %s1267 = ssub.s32 2048, 2048
          %1268 = vsyncadd [#allocation4], %s1267
          %s1269 = sshll.u32 [#allocation11], 4
          %s1270 = int_to_ptr.vmem [resolvable:$true] %s1269
          %1275 = dma.vmem_to_hbm [thread:$0]  %s1270, 2048, %s6, [#allocation4], 128, 128, 8
        $region84: #{tpu_custom_call.1} parent=43 // pred_fallthru
          _
        // Predicated region
        $region85: #{tpu_custom_call.1} parent=43 // pred_check
          %p1276 = pneg %p174
        $region86: #{tpu_custom_call.1} parent=43 // pred_check_branch
          %1278 = sbr.rel (%p1276) target = $region88
        $region87: #{tpu_custom_call.1} parent=43 // pred_region
          %1279 = dma.done [#allocation4], 2048
        $region88: #{tpu_custom_call.1} parent=43 // pred_fallthru
          _
      $region44: #{tpu_custom_call.1} parent=5 // pred_fallthru
        _
      %p1280 = scmp.le.s32.totalorder 2, %s15
      // Predicated region
      $region89: #{tpu_custom_call.1} parent=5 // pred_check
        %p1281 = pneg %p1280
      $region90: #{tpu_custom_call.1} parent=5 // pred_check_branch
        %1283 = sbr.rel (%p1281) target = $region92
      $region91: #{tpu_custom_call.1} parent=5 // pred_region
        %s1284 = ssub.s32 %s15, 2
      $region92: #{tpu_custom_call.1} parent=5 // pred_fallthru
        _
    $region6: #{tpu_custom_call.1} parent=1 // loop_footer
      %s19 = sadd.s32 1, %s15
    $region7: #{tpu_custom_call.1} parent=1 // loop_footer_branch
      %14 = sbr.rel target = $region3
    $region8: #{tpu_custom_call.1} parent=1 // loop_exit
      _
    %1285 = vsyncpa [#allocation3], 1
    %s1286 = scalar_lea.sflag [#allocation3], 1
    %1287 = vsyncpa %s1286, 1
    %1288 = vsyncpa [#allocation6], 1
    %1289 = vsyncpa [#allocation4], 1
    %s1290 = scalar_lea.sflag [#allocation4], 1
    %1291 = vsyncpa %s1290, 1

</llo_original>
